<compile_context>
chip_gen: v5e
topology: v5e:2x2
jax: 0.10.0
libtpu: 0.0.40
codegen_flags: <defaults>
</compile_context>

<pallas_src>
import jax
import jax.numpy as jnp
from jax.experimental import pallas as pl
from jax.experimental.pallas import tpu as pltpu


def _round_up(n: int, m: int) -> int:
    return ((n + m - 1) // m) * m


def subnet_kernel(tT_ref, xT_ref, w1x_ref, w1t_ref, b1_ref,
                  w2_ref, b2_ref, w3_ref, b3_ref, oT_ref):
    # Shapes (per grid step):
    #   tT_ref : (1,   TILE_B)   time, transposed (batch on lanes)
    #   xT_ref : (dim, TILE_B)   x, transposed
    #   w1x    : (H, dim) f32   w1t: (H, 1) f32   b1: (H, 1) f32
    #   w2     : (H, H)  bf16   b2: (H, 1) f32
    #   w3     : (dim, H) f32   b3: (dim, 1) f32
    #   oT_ref : (dim, TILE_B)  lane-dense output block
    xT = xT_ref[...]
    tT = tT_ref[...]
    dim = xT.shape[0]
    hidden = w2_ref.shape[0]

    # ---- Layer 1: h = relu(W1_x @ x^T + w1_time * time^T + b1) -> (H, TILE_B)
    # time term + bias: rank-1 broadcast FMA on the VPU (no lane concat).
    h = w1t_ref[...] * tT + b1_ref[...]
    if dim <= 32:
        # K is tiny vs. the 128/256-deep MXU: dim rank-1 VPU FMAs instead of a
        # nearly empty MXU pass that still streams all TILE_B columns.
        for k in range(dim):
            h = h + w1x_ref[:, k:k + 1] * xT[k:k + 1, :]
    else:
        h = h + jnp.dot(w1x_ref[...].astype(jnp.bfloat16),
                        xT.astype(jnp.bfloat16),
                        preferred_element_type=jnp.float32)
    h = jnp.maximum(h, 0.0)

    # ---- Layer 2: relu(W2 @ h + b2) -> (H, TILE_B)
    # bf16 MXU operands (w2 already bf16), f32 accumulation.
    h = jnp.dot(w2_ref[...], h.astype(jnp.bfloat16),
                preferred_element_type=jnp.float32) + b2_ref[...]
    h = jnp.maximum(h, 0.0)

    # ---- Layer 3: W3 @ h + b3 -> (dim, TILE_B)
    if dim <= 32:
        # M=dim is tiny: the MXU pass would be <2% utilized yet cost as much
        # streaming time as layer 2.  Accumulate rank-1 VPU FMAs over the H
        # hidden rows instead (fills idle VALU slots, f32 throughout).
        out = b3_ref[...] + w3_ref[:, 0:1] * h[0:1, :]
        for j in range(1, hidden):
            out = out + w3_ref[:, j:j + 1] * h[j:j + 1, :]
    else:
        out = jnp.dot(w3_ref[...].astype(jnp.bfloat16), h.astype(jnp.bfloat16),
                      preferred_element_type=jnp.float32) + b3_ref[...]
    oT_ref[...] = out.astype(oT_ref.dtype)


def subnet_forward(x, time, params, tile_b=8192):
    """x: (B, dim) f32, time: (B, 1) f32. Returns (B, dim) f32.

    Weights are in PyTorch nn.Linear layout: w* is (out, in), b* is (out,).
    """
    w1, b1, w2, b2, w3, b3 = params
    B, dim = x.shape
    hidden = w1.shape[0]

    # Batch tile: multiple of 128 (lane width) so activation/output blocks are
    # lane-dense.  Keep at least 2 grid steps whenever the padded batch allows
    # it so the "parallel" batch axis can be split across v7x's two TCs.
    B128 = _round_up(B, 128)
    TILE_B = min(_round_up(tile_b, 128), B128)
    if B128 >= 256:
        TILE_B = min(TILE_B, _round_up(pl.cdiv(B128, 2), 128))
    n_tiles = pl.cdiv(B, TILE_B)
    B_pad = n_tiles * TILE_B

    # Wrapper-side layout plumbing (pad batch, batch on lanes, split W1's time
    # column, column biases, bf16 w2).  Call this whole function under one jit
    # so XLA can fuse/overlap these relayouts with the kernel and its users.
    x_p = jnp.pad(x, ((0, B_pad - B), (0, 0)))
    t_p = jnp.pad(time, ((0, B_pad - B), (0, 0)))
    xT = x_p.T                              # (dim, B_pad)
    tT = t_p.T                              # (1,   B_pad)
    w1_t = w1[:, :1]                        # (H, 1)  -- column multiplying `time`
    w1_x = w1[:, 1:]                        # (H, dim)
    w2_bf16 = w2.astype(jnp.bfloat16)       # bf16 MXU operand (f32 accumulate)
    b1c = b1.reshape(-1, 1)
    b2c = b2.reshape(-1, 1)
    b3c = b3.reshape(-1, 1)

    act_spec = lambda rows: pl.BlockSpec((rows, TILE_B), lambda i: (0, i))
    # Grid-invariant weights/biases: same block every step -> VMEM resident.
    res_spec = lambda shape: pl.BlockSpec(shape, lambda i: (0, 0))

    flops = 2 * B_pad * ((dim + 1) * hidden + hidden * hidden + hidden * dim)
    bytes_accessed = (4 * B_pad * (2 * dim + 1)
                      + 4 * ((dim + 1) * hidden + hidden * hidden
                             + hidden * dim + 2 * hidden + dim))

    outT = pl.pallas_call(
        subnet_kernel,
        out_shape=jax.ShapeDtypeStruct((dim, B_pad), jnp.float32),
        grid_spec=pl.GridSpec(
            grid=(n_tiles,),
            in_specs=[
                act_spec(1),               # time^T
                act_spec(dim),             # x^T
                res_spec(w1_x.shape),      # (H, dim)
                res_spec(w1_t.shape),      # (H, 1)
                res_spec(b1c.shape),       # (H, 1)
                res_spec(w2_bf16.shape),   # (H, H) bf16
                res_spec(b2c.shape),       # (H, 1)
                res_spec(w3.shape),        # (dim, H)
                res_spec(b3c.shape),       # (dim, 1)
            ],
            out_specs=act_spec(dim),       # (dim, TILE_B) lane-dense output
        ),
        compiler_params=pltpu.CompilerParams(
            dimension_semantics=("parallel",),  # megacore sharding on v7x
        ),
        cost_estimate=pl.CostEstimate(
            flops=flops, transcendentals=0, bytes_accessed=bytes_accessed),
    )(tT, xT, w1_x, w1_t, b1c, w2_bf16, b2c, w3, b3c)

    return outT.T[:B]


def init_params(key, dim, hidden=64):
    """Deterministic synthetic parameters in PyTorch nn.Linear layout
    (weight: (out, in), bias: (out,))."""
    ks = jax.random.split(key, 6)
    scale = 0.1
    w1 = scale * jax.random.normal(ks[0], (hidden, dim + 1), jnp.float32)
    b1 = scale * jax.random.normal(ks[1], (hidden,), jnp.float32)
    w2 = scale * jax.random.normal(ks[2], (hidden, hidden), jnp.float32)
    b2 = scale * jax.random.normal(ks[3], (hidden,), jnp.float32)
    w3 = scale * jax.random.normal(ks[4], (dim, hidden), jnp.float32)
    b3 = scale * jax.random.normal(ks[5], (dim,), jnp.float32)
    return (w1, b1, w2, b2, w3, b3)


def subnet_reference(x, time, params):
    """Pure-JAX reference matching torch: y = x @ W.T + b per layer."""
    w1, b1, w2, b2, w3, b3 = params
    xt = jnp.concatenate([time, x], axis=-1)
    h = jnp.maximum(xt @ w1.T + b1, 0.0)
    h = jnp.maximum(h @ w2.T + b2, 0.0)
    return h @ w3.T + b3


if __name__ == "__main__":
    key = jax.random.PRNGKey(0)
    k_p, k_x, k_t = jax.random.split(key, 3)

    # Small shapes consistent with the module: dim=4 (MLP input dim+1=5).
    # B=300 exercises batch padding and a 2-step (megacore-splittable) grid.
    B, dim = 300, 4
    params = init_params(k_p, dim)
    x = jax.random.normal(k_x, (B, dim), jnp.float32)
    time = jax.random.normal(k_t, (B, 1), jnp.float32)

    fwd = jax.jit(subnet_forward)
    out = jax.block_until_ready(fwd(x, time, params))

    ref = subnet_reference(x, time, params)
    assert out.shape == (B, dim)
    # Layer 2 now uses bf16 MXU operands (f32 accumulation), so the check is
    # loosened from 1e-4 to 1e-2 as anticipated by the performance review.
    assert jnp.allclose(out, ref, atol=1e-2, rtol=1e-2), "mismatch vs reference"

    print("KERNEL_OK")
</pallas_src>

<mosaic_0001>
module attributes {stable_mosaic.version = 11 : i64} {
  func.func @subnet_kernel(%arg0: i32, %arg1: memref<1x256xf32, #tpu.memory_space<vmem>>, %arg2: memref<4x256xf32, #tpu.memory_space<vmem>>, %arg3: memref<64x4xf32, #tpu.memory_space<vmem>>, %arg4: memref<64x1xf32, #tpu.memory_space<vmem>>, %arg5: memref<64x1xf32, #tpu.memory_space<vmem>>, %arg6: memref<64x64xbf16, #tpu.memory_space<vmem>>, %arg7: memref<64x1xf32, #tpu.memory_space<vmem>>, %arg8: memref<4x64xf32, #tpu.memory_space<vmem>>, %arg9: memref<4x1xf32, #tpu.memory_space<vmem>>, %arg10: memref<4x256xf32, #tpu.memory_space<vmem>>) attributes {dimension_semantics = [#tpu.dimension_semantics<parallel>], iteration_bounds = array<i64: 2>, scalar_prefetch = 0 : i64, scratch_operands = 0 : i64, tpu.core_type = #tpu.core_type<tc>, window_params = [{transform_indices = @transform_0, window_bounds = array<i64: 1, 256>}, {transform_indices = @transform_1, window_bounds = array<i64: 4, 256>}, {pipeline_mode = #tpu.pipeline_mode<synchronous>, transform_indices = @transform_2, window_bounds = array<i64: 64, 4>}, {pipeline_mode = #tpu.pipeline_mode<synchronous>, transform_indices = @transform_3, window_bounds = array<i64: 64, 1>}, {pipeline_mode = #tpu.pipeline_mode<synchronous>, transform_indices = @transform_4, window_bounds = array<i64: 64, 1>}, {pipeline_mode = #tpu.pipeline_mode<synchronous>, transform_indices = @transform_5, window_bounds = array<i64: 64, 64>}, {pipeline_mode = #tpu.pipeline_mode<synchronous>, transform_indices = @transform_6, window_bounds = array<i64: 64, 1>}, {pipeline_mode = #tpu.pipeline_mode<synchronous>, transform_indices = @transform_7, window_bounds = array<i64: 4, 64>}, {pipeline_mode = #tpu.pipeline_mode<synchronous>, transform_indices = @transform_8, window_bounds = array<i64: 4, 1>}, {transform_indices = @transform_9, window_bounds = array<i64: 4, 256>}]} {
    %c0 = arith.constant 0 : index
    %c0_0 = arith.constant 0 : index
    %0 = vector.load %arg2[%c0, %c0_0] : memref<4x256xf32, #tpu.memory_space<vmem>>, vector<4x256xf32>
    %c0_1 = arith.constant 0 : index
    %c0_2 = arith.constant 0 : index
    %1 = vector.load %arg1[%c0_1, %c0_2] : memref<1x256xf32, #tpu.memory_space<vmem>>, vector<1x256xf32>
    %c0_3 = arith.constant 0 : index
    %c0_4 = arith.constant 0 : index
    %2 = vector.load %arg4[%c0_3, %c0_4] : memref<64x1xf32, #tpu.memory_space<vmem>>, vector<64x1xf32>
    %3 = vector.broadcast %2 : vector<64x1xf32> to vector<64x256xf32>
    %4 = vector.broadcast %1 : vector<1x256xf32> to vector<64x256xf32>
    %5 = arith.mulf %3, %4 : vector<64x256xf32>
    %c0_5 = arith.constant 0 : index
    %c0_6 = arith.constant 0 : index
    %6 = vector.load %arg5[%c0_5, %c0_6] : memref<64x1xf32, #tpu.memory_space<vmem>>, vector<64x1xf32>
    %7 = vector.broadcast %6 : vector<64x1xf32> to vector<64x256xf32>
    %8 = arith.addf %5, %7 : vector<64x256xf32>
    %c0_7 = arith.constant 0 : index
    %c0_8 = arith.constant 0 : index
    %9 = vector.load %arg3[%c0_7, %c0_8] : memref<64x4xf32, #tpu.memory_space<vmem>>, vector<64x1xf32>
    %10 = vector.extract_strided_slice %0 {offsets = [0, 0], sizes = [1, 256], strides = [1, 1]} : vector<4x256xf32> to vector<1x256xf32>
    %11 = vector.broadcast %9 : vector<64x1xf32> to vector<64x256xf32>
    %12 = vector.broadcast %10 : vector<1x256xf32> to vector<64x256xf32>
    %13 = arith.mulf %11, %12 : vector<64x256xf32>
    %14 = arith.addf %8, %13 : vector<64x256xf32>
    %c0_9 = arith.constant 0 : index
    %c1 = arith.constant 1 : index
    %15 = vector.load %arg3[%c0_9, %c1] : memref<64x4xf32, #tpu.memory_space<vmem>>, vector<64x1xf32>
    %16 = vector.extract_strided_slice %0 {offsets = [1, 0], sizes = [1, 256], strides = [1, 1]} : vector<4x256xf32> to vector<1x256xf32>
    %17 = vector.broadcast %15 : vector<64x1xf32> to vector<64x256xf32>
    %18 = vector.broadcast %16 : vector<1x256xf32> to vector<64x256xf32>
    %19 = arith.mulf %17, %18 : vector<64x256xf32>
    %20 = arith.addf %14, %19 : vector<64x256xf32>
    %c0_10 = arith.constant 0 : index
    %c2 = arith.constant 2 : index
    %21 = vector.load %arg3[%c0_10, %c2] : memref<64x4xf32, #tpu.memory_space<vmem>>, vector<64x1xf32>
    %22 = vector.extract_strided_slice %0 {offsets = [2, 0], sizes = [1, 256], strides = [1, 1]} : vector<4x256xf32> to vector<1x256xf32>
    %23 = vector.broadcast %21 : vector<64x1xf32> to vector<64x256xf32>
    %24 = vector.broadcast %22 : vector<1x256xf32> to vector<64x256xf32>
    %25 = arith.mulf %23, %24 : vector<64x256xf32>
    %26 = arith.addf %20, %25 : vector<64x256xf32>
    %c0_11 = arith.constant 0 : index
    %c3 = arith.constant 3 : index
    %27 = vector.load %arg3[%c0_11, %c3] : memref<64x4xf32, #tpu.memory_space<vmem>>, vector<64x1xf32>
    %28 = vector.extract_strided_slice %0 {offsets = [3, 0], sizes = [1, 256], strides = [1, 1]} : vector<4x256xf32> to vector<1x256xf32>
    %29 = vector.broadcast %27 : vector<64x1xf32> to vector<64x256xf32>
    %30 = vector.broadcast %28 : vector<1x256xf32> to vector<64x256xf32>
    %31 = arith.mulf %29, %30 : vector<64x256xf32>
    %32 = arith.addf %26, %31 : vector<64x256xf32>
    %cst = arith.constant 0.000000e+00 : f32
    %33 = vector.broadcast %cst : f32 to vector<64x256xf32>
    %34 = arith.maximumf %32, %33 : vector<64x256xf32>
    %c0_12 = arith.constant 0 : index
    %c0_13 = arith.constant 0 : index
    %35 = vector.load %arg6[%c0_12, %c0_13] : memref<64x64xbf16, #tpu.memory_space<vmem>>, vector<64x64xbf16>
    %36 = arith.truncf %34 : vector<64x256xf32> to vector<64x256xbf16>
    %cst_14 = arith.constant dense<0.000000e+00> : vector<64x256xf32>
    %37 = tpu.matmul %35, %36, %cst_14 {dimension_numbers = #tpu.dot_dimension_numbers<[1], [0], [0], [1], [0, 0, 1, 1], [], []>} : vector<64x64xbf16>, vector<64x256xbf16>, vector<64x256xf32> -> vector<64x256xf32>
    %c0_15 = arith.constant 0 : index
    %c0_16 = arith.constant 0 : index
    %38 = vector.load %arg7[%c0_15, %c0_16] : memref<64x1xf32, #tpu.memory_space<vmem>>, vector<64x1xf32>
    %39 = vector.broadcast %38 : vector<64x1xf32> to vector<64x256xf32>
    %40 = arith.addf %37, %39 : vector<64x256xf32>
    %cst_17 = arith.constant 0.000000e+00 : f32
    %41 = vector.broadcast %cst_17 : f32 to vector<64x256xf32>
    %42 = arith.maximumf %40, %41 : vector<64x256xf32>
    %c0_18 = arith.constant 0 : index
    %c0_19 = arith.constant 0 : index
    %43 = vector.load %arg9[%c0_18, %c0_19] : memref<4x1xf32, #tpu.memory_space<vmem>>, vector<4x1xf32>
    %c0_20 = arith.constant 0 : index
    %c0_21 = arith.constant 0 : index
    %44 = vector.load %arg8[%c0_20, %c0_21] : memref<4x64xf32, #tpu.memory_space<vmem>>, vector<4x1xf32>
    %45 = vector.extract_strided_slice %42 {offsets = [0, 0], sizes = [1, 256], strides = [1, 1]} : vector<64x256xf32> to vector<1x256xf32>
    %46 = vector.broadcast %44 : vector<4x1xf32> to vector<4x256xf32>
    %47 = vector.broadcast %45 : vector<1x256xf32> to vector<4x256xf32>
    %48 = arith.mulf %46, %47 : vector<4x256xf32>
    %49 = vector.broadcast %43 : vector<4x1xf32> to vector<4x256xf32>
    %50 = arith.addf %49, %48 : vector<4x256xf32>
    %c0_22 = arith.constant 0 : index
    %c1_23 = arith.constant 1 : index
    %51 = vector.load %arg8[%c0_22, %c1_23] : memref<4x64xf32, #tpu.memory_space<vmem>>, vector<4x1xf32>
    %52 = vector.extract_strided_slice %42 {offsets = [1, 0], sizes = [1, 256], strides = [1, 1]} : vector<64x256xf32> to vector<1x256xf32>
    %53 = vector.broadcast %51 : vector<4x1xf32> to vector<4x256xf32>
    %54 = vector.broadcast %52 : vector<1x256xf32> to vector<4x256xf32>
    %55 = arith.mulf %53, %54 : vector<4x256xf32>
    %56 = arith.addf %50, %55 : vector<4x256xf32>
    %c0_24 = arith.constant 0 : index
    %c2_25 = arith.constant 2 : index
    %57 = vector.load %arg8[%c0_24, %c2_25] : memref<4x64xf32, #tpu.memory_space<vmem>>, vector<4x1xf32>
    %58 = vector.extract_strided_slice %42 {offsets = [2, 0], sizes = [1, 256], strides = [1, 1]} : vector<64x256xf32> to vector<1x256xf32>
    %59 = vector.broadcast %57 : vector<4x1xf32> to vector<4x256xf32>
    %60 = vector.broadcast %58 : vector<1x256xf32> to vector<4x256xf32>
    %61 = arith.mulf %59, %60 : vector<4x256xf32>
    %62 = arith.addf %56, %61 : vector<4x256xf32>
    %c0_26 = arith.constant 0 : index
    %c3_27 = arith.constant 3 : index
    %63 = vector.load %arg8[%c0_26, %c3_27] : memref<4x64xf32, #tpu.memory_space<vmem>>, vector<4x1xf32>
    %64 = vector.extract_strided_slice %42 {offsets = [3, 0], sizes = [1, 256], strides = [1, 1]} : vector<64x256xf32> to vector<1x256xf32>
    %65 = vector.broadcast %63 : vector<4x1xf32> to vector<4x256xf32>
    %66 = vector.broadcast %64 : vector<1x256xf32> to vector<4x256xf32>
    %67 = arith.mulf %65, %66 : vector<4x256xf32>
    %68 = arith.addf %62, %67 : vector<4x256xf32>
    %c0_28 = arith.constant 0 : index
    %c4 = arith.constant 4 : index
    %69 = vector.load %arg8[%c0_28, %c4] : memref<4x64xf32, #tpu.memory_space<vmem>>, vector<4x1xf32>
    %70 = vector.extract_strided_slice %42 {offsets = [4, 0], sizes = [1, 256], strides = [1, 1]} : vector<64x256xf32> to vector<1x256xf32>
    %71 = vector.broadcast %69 : vector<4x1xf32> to vector<4x256xf32>
    %72 = vector.broadcast %70 : vector<1x256xf32> to vector<4x256xf32>
    %73 = arith.mulf %71, %72 : vector<4x256xf32>
    %74 = arith.addf %68, %73 : vector<4x256xf32>
    %c0_29 = arith.constant 0 : index
    %c5 = arith.constant 5 : index
    %75 = vector.load %arg8[%c0_29, %c5] : memref<4x64xf32, #tpu.memory_space<vmem>>, vector<4x1xf32>
    %76 = vector.extract_strided_slice %42 {offsets = [5, 0], sizes = [1, 256], strides = [1, 1]} : vector<64x256xf32> to vector<1x256xf32>
    %77 = vector.broadcast %75 : vector<4x1xf32> to vector<4x256xf32>
    %78 = vector.broadcast %76 : vector<1x256xf32> to vector<4x256xf32>
    %79 = arith.mulf %77, %78 : vector<4x256xf32>
    %80 = arith.addf %74, %79 : vector<4x256xf32>
    %c0_30 = arith.constant 0 : index
    %c6 = arith.constant 6 : index
    %81 = vector.load %arg8[%c0_30, %c6] : memref<4x64xf32, #tpu.memory_space<vmem>>, vector<4x1xf32>
    %82 = vector.extract_strided_slice %42 {offsets = [6, 0], sizes = [1, 256], strides = [1, 1]} : vector<64x256xf32> to vector<1x256xf32>
    %83 = vector.broadcast %81 : vector<4x1xf32> to vector<4x256xf32>
    %84 = vector.broadcast %82 : vector<1x256xf32> to vector<4x256xf32>
    %85 = arith.mulf %83, %84 : vector<4x256xf32>
    %86 = arith.addf %80, %85 : vector<4x256xf32>
    %c0_31 = arith.constant 0 : index
    %c7 = arith.constant 7 : index
    %87 = vector.load %arg8[%c0_31, %c7] : memref<4x64xf32, #tpu.memory_space<vmem>>, vector<4x1xf32>
    %88 = vector.extract_strided_slice %42 {offsets = [7, 0], sizes = [1, 256], strides = [1, 1]} : vector<64x256xf32> to vector<1x256xf32>
    %89 = vector.broadcast %87 : vector<4x1xf32> to vector<4x256xf32>
    %90 = vector.broadcast %88 : vector<1x256xf32> to vector<4x256xf32>
    %91 = arith.mulf %89, %90 : vector<4x256xf32>
    %92 = arith.addf %86, %91 : vector<4x256xf32>
    %c0_32 = arith.constant 0 : index
    %c8 = arith.constant 8 : index
    %93 = vector.load %arg8[%c0_32, %c8] : memref<4x64xf32, #tpu.memory_space<vmem>>, vector<4x1xf32>
    %94 = vector.extract_strided_slice %42 {offsets = [8, 0], sizes = [1, 256], strides = [1, 1]} : vector<64x256xf32> to vector<1x256xf32>
    %95 = vector.broadcast %93 : vector<4x1xf32> to vector<4x256xf32>
    %96 = vector.broadcast %94 : vector<1x256xf32> to vector<4x256xf32>
    %97 = arith.mulf %95, %96 : vector<4x256xf32>
    %98 = arith.addf %92, %97 : vector<4x256xf32>
    %c0_33 = arith.constant 0 : index
    %c9 = arith.constant 9 : index
    %99 = vector.load %arg8[%c0_33, %c9] : memref<4x64xf32, #tpu.memory_space<vmem>>, vector<4x1xf32>
    %100 = vector.extract_strided_slice %42 {offsets = [9, 0], sizes = [1, 256], strides = [1, 1]} : vector<64x256xf32> to vector<1x256xf32>
    %101 = vector.broadcast %99 : vector<4x1xf32> to vector<4x256xf32>
    %102 = vector.broadcast %100 : vector<1x256xf32> to vector<4x256xf32>
    %103 = arith.mulf %101, %102 : vector<4x256xf32>
    %104 = arith.addf %98, %103 : vector<4x256xf32>
    %c0_34 = arith.constant 0 : index
    %c10 = arith.constant 10 : index
    %105 = vector.load %arg8[%c0_34, %c10] : memref<4x64xf32, #tpu.memory_space<vmem>>, vector<4x1xf32>
    %106 = vector.extract_strided_slice %42 {offsets = [10, 0], sizes = [1, 256], strides = [1, 1]} : vector<64x256xf32> to vector<1x256xf32>
    %107 = vector.broadcast %105 : vector<4x1xf32> to vector<4x256xf32>
    %108 = vector.broadcast %106 : vector<1x256xf32> to vector<4x256xf32>
    %109 = arith.mulf %107, %108 : vector<4x256xf32>
    %110 = arith.addf %104, %109 : vector<4x256xf32>
    %c0_35 = arith.constant 0 : index
    %c11 = arith.constant 11 : index
    %111 = vector.load %arg8[%c0_35, %c11] : memref<4x64xf32, #tpu.memory_space<vmem>>, vector<4x1xf32>
    %112 = vector.extract_strided_slice %42 {offsets = [11, 0], sizes = [1, 256], strides = [1, 1]} : vector<64x256xf32> to vector<1x256xf32>
    %113 = vector.broadcast %111 : vector<4x1xf32> to vector<4x256xf32>
    %114 = vector.broadcast %112 : vector<1x256xf32> to vector<4x256xf32>
    %115 = arith.mulf %113, %114 : vector<4x256xf32>
    %116 = arith.addf %110, %115 : vector<4x256xf32>
    %c0_36 = arith.constant 0 : index
    %c12 = arith.constant 12 : index
    %117 = vector.load %arg8[%c0_36, %c12] : memref<4x64xf32, #tpu.memory_space<vmem>>, vector<4x1xf32>
    %118 = vector.extract_strided_slice %42 {offsets = [12, 0], sizes = [1, 256], strides = [1, 1]} : vector<64x256xf32> to vector<1x256xf32>
    %119 = vector.broadcast %117 : vector<4x1xf32> to vector<4x256xf32>
    %120 = vector.broadcast %118 : vector<1x256xf32> to vector<4x256xf32>
    %121 = arith.mulf %119, %120 : vector<4x256xf32>
    %122 = arith.addf %116, %121 : vector<4x256xf32>
    %c0_37 = arith.constant 0 : index
    %c13 = arith.constant 13 : index
    %123 = vector.load %arg8[%c0_37, %c13] : memref<4x64xf32, #tpu.memory_space<vmem>>, vector<4x1xf32>
    %124 = vector.extract_strided_slice %42 {offsets = [13, 0], sizes = [1, 256], strides = [1, 1]} : vector<64x256xf32> to vector<1x256xf32>
    %125 = vector.broadcast %123 : vector<4x1xf32> to vector<4x256xf32>
    %126 = vector.broadcast %124 : vector<1x256xf32> to vector<4x256xf32>
    %127 = arith.mulf %125, %126 : vector<4x256xf32>
    %128 = arith.addf %122, %127 : vector<4x256xf32>
    %c0_38 = arith.constant 0 : index
    %c14 = arith.constant 14 : index
    %129 = vector.load %arg8[%c0_38, %c14] : memref<4x64xf32, #tpu.memory_space<vmem>>, vector<4x1xf32>
    %130 = vector.extract_strided_slice %42 {offsets = [14, 0], sizes = [1, 256], strides = [1, 1]} : vector<64x256xf32> to vector<1x256xf32>
    %131 = vector.broadcast %129 : vector<4x1xf32> to vector<4x256xf32>
    %132 = vector.broadcast %130 : vector<1x256xf32> to vector<4x256xf32>
    %133 = arith.mulf %131, %132 : vector<4x256xf32>
    %134 = arith.addf %128, %133 : vector<4x256xf32>
    %c0_39 = arith.constant 0 : index
    %c15 = arith.constant 15 : index
    %135 = vector.load %arg8[%c0_39, %c15] : memref<4x64xf32, #tpu.memory_space<vmem>>, vector<4x1xf32>
    %136 = vector.extract_strided_slice %42 {offsets = [15, 0], sizes = [1, 256], strides = [1, 1]} : vector<64x256xf32> to vector<1x256xf32>
    %137 = vector.broadcast %135 : vector<4x1xf32> to vector<4x256xf32>
    %138 = vector.broadcast %136 : vector<1x256xf32> to vector<4x256xf32>
    %139 = arith.mulf %137, %138 : vector<4x256xf32>
    %140 = arith.addf %134, %139 : vector<4x256xf32>
    %c0_40 = arith.constant 0 : index
    %c16 = arith.constant 16 : index
    %141 = vector.load %arg8[%c0_40, %c16] : memref<4x64xf32, #tpu.memory_space<vmem>>, vector<4x1xf32>
    %142 = vector.extract_strided_slice %42 {offsets = [16, 0], sizes = [1, 256], strides = [1, 1]} : vector<64x256xf32> to vector<1x256xf32>
    %143 = vector.broadcast %141 : vector<4x1xf32> to vector<4x256xf32>
    %144 = vector.broadcast %142 : vector<1x256xf32> to vector<4x256xf32>
    %145 = arith.mulf %143, %144 : vector<4x256xf32>
    %146 = arith.addf %140, %145 : vector<4x256xf32>
    %c0_41 = arith.constant 0 : index
    %c17 = arith.constant 17 : index
    %147 = vector.load %arg8[%c0_41, %c17] : memref<4x64xf32, #tpu.memory_space<vmem>>, vector<4x1xf32>
    %148 = vector.extract_strided_slice %42 {offsets = [17, 0], sizes = [1, 256], strides = [1, 1]} : vector<64x256xf32> to vector<1x256xf32>
    %149 = vector.broadcast %147 : vector<4x1xf32> to vector<4x256xf32>
    %150 = vector.broadcast %148 : vector<1x256xf32> to vector<4x256xf32>
    %151 = arith.mulf %149, %150 : vector<4x256xf32>
    %152 = arith.addf %146, %151 : vector<4x256xf32>
    %c0_42 = arith.constant 0 : index
    %c18 = arith.constant 18 : index
    %153 = vector.load %arg8[%c0_42, %c18] : memref<4x64xf32, #tpu.memory_space<vmem>>, vector<4x1xf32>
    %154 = vector.extract_strided_slice %42 {offsets = [18, 0], sizes = [1, 256], strides = [1, 1]} : vector<64x256xf32> to vector<1x256xf32>
    %155 = vector.broadcast %153 : vector<4x1xf32> to vector<4x256xf32>
    %156 = vector.broadcast %154 : vector<1x256xf32> to vector<4x256xf32>
    %157 = arith.mulf %155, %156 : vector<4x256xf32>
    %158 = arith.addf %152, %157 : vector<4x256xf32>
    %c0_43 = arith.constant 0 : index
    %c19 = arith.constant 19 : index
    %159 = vector.load %arg8[%c0_43, %c19] : memref<4x64xf32, #tpu.memory_space<vmem>>, vector<4x1xf32>
    %160 = vector.extract_strided_slice %42 {offsets = [19, 0], sizes = [1, 256], strides = [1, 1]} : vector<64x256xf32> to vector<1x256xf32>
    %161 = vector.broadcast %159 : vector<4x1xf32> to vector<4x256xf32>
    %162 = vector.broadcast %160 : vector<1x256xf32> to vector<4x256xf32>
    %163 = arith.mulf %161, %162 : vector<4x256xf32>
    %164 = arith.addf %158, %163 : vector<4x256xf32>
    %c0_44 = arith.constant 0 : index
    %c20 = arith.constant 20 : index
    %165 = vector.load %arg8[%c0_44, %c20] : memref<4x64xf32, #tpu.memory_space<vmem>>, vector<4x1xf32>
    %166 = vector.extract_strided_slice %42 {offsets = [20, 0], sizes = [1, 256], strides = [1, 1]} : vector<64x256xf32> to vector<1x256xf32>
    %167 = vector.broadcast %165 : vector<4x1xf32> to vector<4x256xf32>
    %168 = vector.broadcast %166 : vector<1x256xf32> to vector<4x256xf32>
    %169 = arith.mulf %167, %168 : vector<4x256xf32>
    %170 = arith.addf %164, %169 : vector<4x256xf32>
    %c0_45 = arith.constant 0 : index
    %c21 = arith.constant 21 : index
    %171 = vector.load %arg8[%c0_45, %c21] : memref<4x64xf32, #tpu.memory_space<vmem>>, vector<4x1xf32>
    %172 = vector.extract_strided_slice %42 {offsets = [21, 0], sizes = [1, 256], strides = [1, 1]} : vector<64x256xf32> to vector<1x256xf32>
    %173 = vector.broadcast %171 : vector<4x1xf32> to vector<4x256xf32>
    %174 = vector.broadcast %172 : vector<1x256xf32> to vector<4x256xf32>
    %175 = arith.mulf %173, %174 : vector<4x256xf32>
    %176 = arith.addf %170, %175 : vector<4x256xf32>
    %c0_46 = arith.constant 0 : index
    %c22 = arith.constant 22 : index
    %177 = vector.load %arg8[%c0_46, %c22] : memref<4x64xf32, #tpu.memory_space<vmem>>, vector<4x1xf32>
    %178 = vector.extract_strided_slice %42 {offsets = [22, 0], sizes = [1, 256], strides = [1, 1]} : vector<64x256xf32> to vector<1x256xf32>
    %179 = vector.broadcast %177 : vector<4x1xf32> to vector<4x256xf32>
    %180 = vector.broadcast %178 : vector<1x256xf32> to vector<4x256xf32>
    %181 = arith.mulf %179, %180 : vector<4x256xf32>
    %182 = arith.addf %176, %181 : vector<4x256xf32>
    %c0_47 = arith.constant 0 : index
    %c23 = arith.constant 23 : index
    %183 = vector.load %arg8[%c0_47, %c23] : memref<4x64xf32, #tpu.memory_space<vmem>>, vector<4x1xf32>
    %184 = vector.extract_strided_slice %42 {offsets = [23, 0], sizes = [1, 256], strides = [1, 1]} : vector<64x256xf32> to vector<1x256xf32>
    %185 = vector.broadcast %183 : vector<4x1xf32> to vector<4x256xf32>
    %186 = vector.broadcast %184 : vector<1x256xf32> to vector<4x256xf32>
    %187 = arith.mulf %185, %186 : vector<4x256xf32>
    %188 = arith.addf %182, %187 : vector<4x256xf32>
    %c0_48 = arith.constant 0 : index
    %c24 = arith.constant 24 : index
    %189 = vector.load %arg8[%c0_48, %c24] : memref<4x64xf32, #tpu.memory_space<vmem>>, vector<4x1xf32>
    %190 = vector.extract_strided_slice %42 {offsets = [24, 0], sizes = [1, 256], strides = [1, 1]} : vector<64x256xf32> to vector<1x256xf32>
    %191 = vector.broadcast %189 : vector<4x1xf32> to vector<4x256xf32>
    %192 = vector.broadcast %190 : vector<1x256xf32> to vector<4x256xf32>
    %193 = arith.mulf %191, %192 : vector<4x256xf32>
    %194 = arith.addf %188, %193 : vector<4x256xf32>
    %c0_49 = arith.constant 0 : index
    %c25 = arith.constant 25 : index
    %195 = vector.load %arg8[%c0_49, %c25] : memref<4x64xf32, #tpu.memory_space<vmem>>, vector<4x1xf32>
    %196 = vector.extract_strided_slice %42 {offsets = [25, 0], sizes = [1, 256], strides = [1, 1]} : vector<64x256xf32> to vector<1x256xf32>
    %197 = vector.broadcast %195 : vector<4x1xf32> to vector<4x256xf32>
    %198 = vector.broadcast %196 : vector<1x256xf32> to vector<4x256xf32>
    %199 = arith.mulf %197, %198 : vector<4x256xf32>
    %200 = arith.addf %194, %199 : vector<4x256xf32>
    %c0_50 = arith.constant 0 : index
    %c26 = arith.constant 26 : index
    %201 = vector.load %arg8[%c0_50, %c26] : memref<4x64xf32, #tpu.memory_space<vmem>>, vector<4x1xf32>
    %202 = vector.extract_strided_slice %42 {offsets = [26, 0], sizes = [1, 256], strides = [1, 1]} : vector<64x256xf32> to vector<1x256xf32>
    %203 = vector.broadcast %201 : vector<4x1xf32> to vector<4x256xf32>
    %204 = vector.broadcast %202 : vector<1x256xf32> to vector<4x256xf32>
    %205 = arith.mulf %203, %204 : vector<4x256xf32>
    %206 = arith.addf %200, %205 : vector<4x256xf32>
    %c0_51 = arith.constant 0 : index
    %c27 = arith.constant 27 : index
    %207 = vector.load %arg8[%c0_51, %c27] : memref<4x64xf32, #tpu.memory_space<vmem>>, vector<4x1xf32>
    %208 = vector.extract_strided_slice %42 {offsets = [27, 0], sizes = [1, 256], strides = [1, 1]} : vector<64x256xf32> to vector<1x256xf32>
    %209 = vector.broadcast %207 : vector<4x1xf32> to vector<4x256xf32>
    %210 = vector.broadcast %208 : vector<1x256xf32> to vector<4x256xf32>
    %211 = arith.mulf %209, %210 : vector<4x256xf32>
    %212 = arith.addf %206, %211 : vector<4x256xf32>
    %c0_52 = arith.constant 0 : index
    %c28 = arith.constant 28 : index
    %213 = vector.load %arg8[%c0_52, %c28] : memref<4x64xf32, #tpu.memory_space<vmem>>, vector<4x1xf32>
    %214 = vector.extract_strided_slice %42 {offsets = [28, 0], sizes = [1, 256], strides = [1, 1]} : vector<64x256xf32> to vector<1x256xf32>
    %215 = vector.broadcast %213 : vector<4x1xf32> to vector<4x256xf32>
    %216 = vector.broadcast %214 : vector<1x256xf32> to vector<4x256xf32>
    %217 = arith.mulf %215, %216 : vector<4x256xf32>
    %218 = arith.addf %212, %217 : vector<4x256xf32>
    %c0_53 = arith.constant 0 : index
    %c29 = arith.constant 29 : index
    %219 = vector.load %arg8[%c0_53, %c29] : memref<4x64xf32, #tpu.memory_space<vmem>>, vector<4x1xf32>
    %220 = vector.extract_strided_slice %42 {offsets = [29, 0], sizes = [1, 256], strides = [1, 1]} : vector<64x256xf32> to vector<1x256xf32>
    %221 = vector.broadcast %219 : vector<4x1xf32> to vector<4x256xf32>
    %222 = vector.broadcast %220 : vector<1x256xf32> to vector<4x256xf32>
    %223 = arith.mulf %221, %222 : vector<4x256xf32>
    %224 = arith.addf %218, %223 : vector<4x256xf32>
    %c0_54 = arith.constant 0 : index
    %c30 = arith.constant 30 : index
    %225 = vector.load %arg8[%c0_54, %c30] : memref<4x64xf32, #tpu.memory_space<vmem>>, vector<4x1xf32>
    %226 = vector.extract_strided_slice %42 {offsets = [30, 0], sizes = [1, 256], strides = [1, 1]} : vector<64x256xf32> to vector<1x256xf32>
    %227 = vector.broadcast %225 : vector<4x1xf32> to vector<4x256xf32>
    %228 = vector.broadcast %226 : vector<1x256xf32> to vector<4x256xf32>
    %229 = arith.mulf %227, %228 : vector<4x256xf32>
    %230 = arith.addf %224, %229 : vector<4x256xf32>
    %c0_55 = arith.constant 0 : index
    %c31 = arith.constant 31 : index
    %231 = vector.load %arg8[%c0_55, %c31] : memref<4x64xf32, #tpu.memory_space<vmem>>, vector<4x1xf32>
    %232 = vector.extract_strided_slice %42 {offsets = [31, 0], sizes = [1, 256], strides = [1, 1]} : vector<64x256xf32> to vector<1x256xf32>
    %233 = vector.broadcast %231 : vector<4x1xf32> to vector<4x256xf32>
    %234 = vector.broadcast %232 : vector<1x256xf32> to vector<4x256xf32>
    %235 = arith.mulf %233, %234 : vector<4x256xf32>
    %236 = arith.addf %230, %235 : vector<4x256xf32>
    %c0_56 = arith.constant 0 : index
    %c32 = arith.constant 32 : index
    %237 = vector.load %arg8[%c0_56, %c32] : memref<4x64xf32, #tpu.memory_space<vmem>>, vector<4x1xf32>
    %238 = vector.extract_strided_slice %42 {offsets = [32, 0], sizes = [1, 256], strides = [1, 1]} : vector<64x256xf32> to vector<1x256xf32>
    %239 = vector.broadcast %237 : vector<4x1xf32> to vector<4x256xf32>
    %240 = vector.broadcast %238 : vector<1x256xf32> to vector<4x256xf32>
    %241 = arith.mulf %239, %240 : vector<4x256xf32>
    %242 = arith.addf %236, %241 : vector<4x256xf32>
    %c0_57 = arith.constant 0 : index
    %c33 = arith.constant 33 : index
    %243 = vector.load %arg8[%c0_57, %c33] : memref<4x64xf32, #tpu.memory_space<vmem>>, vector<4x1xf32>
    %244 = vector.extract_strided_slice %42 {offsets = [33, 0], sizes = [1, 256], strides = [1, 1]} : vector<64x256xf32> to vector<1x256xf32>
    %245 = vector.broadcast %243 : vector<4x1xf32> to vector<4x256xf32>
    %246 = vector.broadcast %244 : vector<1x256xf32> to vector<4x256xf32>
    %247 = arith.mulf %245, %246 : vector<4x256xf32>
    %248 = arith.addf %242, %247 : vector<4x256xf32>
    %c0_58 = arith.constant 0 : index
    %c34 = arith.constant 34 : index
    %249 = vector.load %arg8[%c0_58, %c34] : memref<4x64xf32, #tpu.memory_space<vmem>>, vector<4x1xf32>
    %250 = vector.extract_strided_slice %42 {offsets = [34, 0], sizes = [1, 256], strides = [1, 1]} : vector<64x256xf32> to vector<1x256xf32>
    %251 = vector.broadcast %249 : vector<4x1xf32> to vector<4x256xf32>
    %252 = vector.broadcast %250 : vector<1x256xf32> to vector<4x256xf32>
    %253 = arith.mulf %251, %252 : vector<4x256xf32>
    %254 = arith.addf %248, %253 : vector<4x256xf32>
    %c0_59 = arith.constant 0 : index
    %c35 = arith.constant 35 : index
    %255 = vector.load %arg8[%c0_59, %c35] : memref<4x64xf32, #tpu.memory_space<vmem>>, vector<4x1xf32>
    %256 = vector.extract_strided_slice %42 {offsets = [35, 0], sizes = [1, 256], strides = [1, 1]} : vector<64x256xf32> to vector<1x256xf32>
    %257 = vector.broadcast %255 : vector<4x1xf32> to vector<4x256xf32>
    %258 = vector.broadcast %256 : vector<1x256xf32> to vector<4x256xf32>
    %259 = arith.mulf %257, %258 : vector<4x256xf32>
    %260 = arith.addf %254, %259 : vector<4x256xf32>
    %c0_60 = arith.constant 0 : index
    %c36 = arith.constant 36 : index
    %261 = vector.load %arg8[%c0_60, %c36] : memref<4x64xf32, #tpu.memory_space<vmem>>, vector<4x1xf32>
    %262 = vector.extract_strided_slice %42 {offsets = [36, 0], sizes = [1, 256], strides = [1, 1]} : vector<64x256xf32> to vector<1x256xf32>
    %263 = vector.broadcast %261 : vector<4x1xf32> to vector<4x256xf32>
    %264 = vector.broadcast %262 : vector<1x256xf32> to vector<4x256xf32>
    %265 = arith.mulf %263, %264 : vector<4x256xf32>
    %266 = arith.addf %260, %265 : vector<4x256xf32>
    %c0_61 = arith.constant 0 : index
    %c37 = arith.constant 37 : index
    %267 = vector.load %arg8[%c0_61, %c37] : memref<4x64xf32, #tpu.memory_space<vmem>>, vector<4x1xf32>
    %268 = vector.extract_strided_slice %42 {offsets = [37, 0], sizes = [1, 256], strides = [1, 1]} : vector<64x256xf32> to vector<1x256xf32>
    %269 = vector.broadcast %267 : vector<4x1xf32> to vector<4x256xf32>
    %270 = vector.broadcast %268 : vector<1x256xf32> to vector<4x256xf32>
    %271 = arith.mulf %269, %270 : vector<4x256xf32>
    %272 = arith.addf %266, %271 : vector<4x256xf32>
    %c0_62 = arith.constant 0 : index
    %c38 = arith.constant 38 : index
    %273 = vector.load %arg8[%c0_62, %c38] : memref<4x64xf32, #tpu.memory_space<vmem>>, vector<4x1xf32>
    %274 = vector.extract_strided_slice %42 {offsets = [38, 0], sizes = [1, 256], strides = [1, 1]} : vector<64x256xf32> to vector<1x256xf32>
    %275 = vector.broadcast %273 : vector<4x1xf32> to vector<4x256xf32>
    %276 = vector.broadcast %274 : vector<1x256xf32> to vector<4x256xf32>
    %277 = arith.mulf %275, %276 : vector<4x256xf32>
    %278 = arith.addf %272, %277 : vector<4x256xf32>
    %c0_63 = arith.constant 0 : index
    %c39 = arith.constant 39 : index
    %279 = vector.load %arg8[%c0_63, %c39] : memref<4x64xf32, #tpu.memory_space<vmem>>, vector<4x1xf32>
    %280 = vector.extract_strided_slice %42 {offsets = [39, 0], sizes = [1, 256], strides = [1, 1]} : vector<64x256xf32> to vector<1x256xf32>
    %281 = vector.broadcast %279 : vector<4x1xf32> to vector<4x256xf32>
    %282 = vector.broadcast %280 : vector<1x256xf32> to vector<4x256xf32>
    %283 = arith.mulf %281, %282 : vector<4x256xf32>
    %284 = arith.addf %278, %283 : vector<4x256xf32>
    %c0_64 = arith.constant 0 : index
    %c40 = arith.constant 40 : index
    %285 = vector.load %arg8[%c0_64, %c40] : memref<4x64xf32, #tpu.memory_space<vmem>>, vector<4x1xf32>
    %286 = vector.extract_strided_slice %42 {offsets = [40, 0], sizes = [1, 256], strides = [1, 1]} : vector<64x256xf32> to vector<1x256xf32>
    %287 = vector.broadcast %285 : vector<4x1xf32> to vector<4x256xf32>
    %288 = vector.broadcast %286 : vector<1x256xf32> to vector<4x256xf32>
    %289 = arith.mulf %287, %288 : vector<4x256xf32>
    %290 = arith.addf %284, %289 : vector<4x256xf32>
    %c0_65 = arith.constant 0 : index
    %c41 = arith.constant 41 : index
    %291 = vector.load %arg8[%c0_65, %c41] : memref<4x64xf32, #tpu.memory_space<vmem>>, vector<4x1xf32>
    %292 = vector.extract_strided_slice %42 {offsets = [41, 0], sizes = [1, 256], strides = [1, 1]} : vector<64x256xf32> to vector<1x256xf32>
    %293 = vector.broadcast %291 : vector<4x1xf32> to vector<4x256xf32>
    %294 = vector.broadcast %292 : vector<1x256xf32> to vector<4x256xf32>
    %295 = arith.mulf %293, %294 : vector<4x256xf32>
    %296 = arith.addf %290, %295 : vector<4x256xf32>
    %c0_66 = arith.constant 0 : index
    %c42 = arith.constant 42 : index
    %297 = vector.load %arg8[%c0_66, %c42] : memref<4x64xf32, #tpu.memory_space<vmem>>, vector<4x1xf32>
    %298 = vector.extract_strided_slice %42 {offsets = [42, 0], sizes = [1, 256], strides = [1, 1]} : vector<64x256xf32> to vector<1x256xf32>
    %299 = vector.broadcast %297 : vector<4x1xf32> to vector<4x256xf32>
    %300 = vector.broadcast %298 : vector<1x256xf32> to vector<4x256xf32>
    %301 = arith.mulf %299, %300 : vector<4x256xf32>
    %302 = arith.addf %296, %301 : vector<4x256xf32>
    %c0_67 = arith.constant 0 : index
    %c43 = arith.constant 43 : index
    %303 = vector.load %arg8[%c0_67, %c43] : memref<4x64xf32, #tpu.memory_space<vmem>>, vector<4x1xf32>
    %304 = vector.extract_strided_slice %42 {offsets = [43, 0], sizes = [1, 256], strides = [1, 1]} : vector<64x256xf32> to vector<1x256xf32>
    %305 = vector.broadcast %303 : vector<4x1xf32> to vector<4x256xf32>
    %306 = vector.broadcast %304 : vector<1x256xf32> to vector<4x256xf32>
    %307 = arith.mulf %305, %306 : vector<4x256xf32>
    %308 = arith.addf %302, %307 : vector<4x256xf32>
    %c0_68 = arith.constant 0 : index
    %c44 = arith.constant 44 : index
    %309 = vector.load %arg8[%c0_68, %c44] : memref<4x64xf32, #tpu.memory_space<vmem>>, vector<4x1xf32>
    %310 = vector.extract_strided_slice %42 {offsets = [44, 0], sizes = [1, 256], strides = [1, 1]} : vector<64x256xf32> to vector<1x256xf32>
    %311 = vector.broadcast %309 : vector<4x1xf32> to vector<4x256xf32>
    %312 = vector.broadcast %310 : vector<1x256xf32> to vector<4x256xf32>
    %313 = arith.mulf %311, %312 : vector<4x256xf32>
    %314 = arith.addf %308, %313 : vector<4x256xf32>
    %c0_69 = arith.constant 0 : index
    %c45 = arith.constant 45 : index
    %315 = vector.load %arg8[%c0_69, %c45] : memref<4x64xf32, #tpu.memory_space<vmem>>, vector<4x1xf32>
    %316 = vector.extract_strided_slice %42 {offsets = [45, 0], sizes = [1, 256], strides = [1, 1]} : vector<64x256xf32> to vector<1x256xf32>
    %317 = vector.broadcast %315 : vector<4x1xf32> to vector<4x256xf32>
    %318 = vector.broadcast %316 : vector<1x256xf32> to vector<4x256xf32>
    %319 = arith.mulf %317, %318 : vector<4x256xf32>
    %320 = arith.addf %314, %319 : vector<4x256xf32>
    %c0_70 = arith.constant 0 : index
    %c46 = arith.constant 46 : index
    %321 = vector.load %arg8[%c0_70, %c46] : memref<4x64xf32, #tpu.memory_space<vmem>>, vector<4x1xf32>
    %322 = vector.extract_strided_slice %42 {offsets = [46, 0], sizes = [1, 256], strides = [1, 1]} : vector<64x256xf32> to vector<1x256xf32>
    %323 = vector.broadcast %321 : vector<4x1xf32> to vector<4x256xf32>
    %324 = vector.broadcast %322 : vector<1x256xf32> to vector<4x256xf32>
    %325 = arith.mulf %323, %324 : vector<4x256xf32>
    %326 = arith.addf %320, %325 : vector<4x256xf32>
    %c0_71 = arith.constant 0 : index
    %c47 = arith.constant 47 : index
    %327 = vector.load %arg8[%c0_71, %c47] : memref<4x64xf32, #tpu.memory_space<vmem>>, vector<4x1xf32>
    %328 = vector.extract_strided_slice %42 {offsets = [47, 0], sizes = [1, 256], strides = [1, 1]} : vector<64x256xf32> to vector<1x256xf32>
    %329 = vector.broadcast %327 : vector<4x1xf32> to vector<4x256xf32>
    %330 = vector.broadcast %328 : vector<1x256xf32> to vector<4x256xf32>
    %331 = arith.mulf %329, %330 : vector<4x256xf32>
    %332 = arith.addf %326, %331 : vector<4x256xf32>
    %c0_72 = arith.constant 0 : index
    %c48 = arith.constant 48 : index
    %333 = vector.load %arg8[%c0_72, %c48] : memref<4x64xf32, #tpu.memory_space<vmem>>, vector<4x1xf32>
    %334 = vector.extract_strided_slice %42 {offsets = [48, 0], sizes = [1, 256], strides = [1, 1]} : vector<64x256xf32> to vector<1x256xf32>
    %335 = vector.broadcast %333 : vector<4x1xf32> to vector<4x256xf32>
    %336 = vector.broadcast %334 : vector<1x256xf32> to vector<4x256xf32>
    %337 = arith.mulf %335, %336 : vector<4x256xf32>
    %338 = arith.addf %332, %337 : vector<4x256xf32>
    %c0_73 = arith.constant 0 : index
    %c49 = arith.constant 49 : index
    %339 = vector.load %arg8[%c0_73, %c49] : memref<4x64xf32, #tpu.memory_space<vmem>>, vector<4x1xf32>
    %340 = vector.extract_strided_slice %42 {offsets = [49, 0], sizes = [1, 256], strides = [1, 1]} : vector<64x256xf32> to vector<1x256xf32>
    %341 = vector.broadcast %339 : vector<4x1xf32> to vector<4x256xf32>
    %342 = vector.broadcast %340 : vector<1x256xf32> to vector<4x256xf32>
    %343 = arith.mulf %341, %342 : vector<4x256xf32>
    %344 = arith.addf %338, %343 : vector<4x256xf32>
    %c0_74 = arith.constant 0 : index
    %c50 = arith.constant 50 : index
    %345 = vector.load %arg8[%c0_74, %c50] : memref<4x64xf32, #tpu.memory_space<vmem>>, vector<4x1xf32>
    %346 = vector.extract_strided_slice %42 {offsets = [50, 0], sizes = [1, 256], strides = [1, 1]} : vector<64x256xf32> to vector<1x256xf32>
    %347 = vector.broadcast %345 : vector<4x1xf32> to vector<4x256xf32>
    %348 = vector.broadcast %346 : vector<1x256xf32> to vector<4x256xf32>
    %349 = arith.mulf %347, %348 : vector<4x256xf32>
    %350 = arith.addf %344, %349 : vector<4x256xf32>
    %c0_75 = arith.constant 0 : index
    %c51 = arith.constant 51 : index
    %351 = vector.load %arg8[%c0_75, %c51] : memref<4x64xf32, #tpu.memory_space<vmem>>, vector<4x1xf32>
    %352 = vector.extract_strided_slice %42 {offsets = [51, 0], sizes = [1, 256], strides = [1, 1]} : vector<64x256xf32> to vector<1x256xf32>
    %353 = vector.broadcast %351 : vector<4x1xf32> to vector<4x256xf32>
    %354 = vector.broadcast %352 : vector<1x256xf32> to vector<4x256xf32>
    %355 = arith.mulf %353, %354 : vector<4x256xf32>
    %356 = arith.addf %350, %355 : vector<4x256xf32>
    %c0_76 = arith.constant 0 : index
    %c52 = arith.constant 52 : index
    %357 = vector.load %arg8[%c0_76, %c52] : memref<4x64xf32, #tpu.memory_space<vmem>>, vector<4x1xf32>
    %358 = vector.extract_strided_slice %42 {offsets = [52, 0], sizes = [1, 256], strides = [1, 1]} : vector<64x256xf32> to vector<1x256xf32>
    %359 = vector.broadcast %357 : vector<4x1xf32> to vector<4x256xf32>
    %360 = vector.broadcast %358 : vector<1x256xf32> to vector<4x256xf32>
    %361 = arith.mulf %359, %360 : vector<4x256xf32>
    %362 = arith.addf %356, %361 : vector<4x256xf32>
    %c0_77 = arith.constant 0 : index
    %c53 = arith.constant 53 : index
    %363 = vector.load %arg8[%c0_77, %c53] : memref<4x64xf32, #tpu.memory_space<vmem>>, vector<4x1xf32>
    %364 = vector.extract_strided_slice %42 {offsets = [53, 0], sizes = [1, 256], strides = [1, 1]} : vector<64x256xf32> to vector<1x256xf32>
    %365 = vector.broadcast %363 : vector<4x1xf32> to vector<4x256xf32>
    %366 = vector.broadcast %364 : vector<1x256xf32> to vector<4x256xf32>
    %367 = arith.mulf %365, %366 : vector<4x256xf32>
    %368 = arith.addf %362, %367 : vector<4x256xf32>
    %c0_78 = arith.constant 0 : index
    %c54 = arith.constant 54 : index
    %369 = vector.load %arg8[%c0_78, %c54] : memref<4x64xf32, #tpu.memory_space<vmem>>, vector<4x1xf32>
    %370 = vector.extract_strided_slice %42 {offsets = [54, 0], sizes = [1, 256], strides = [1, 1]} : vector<64x256xf32> to vector<1x256xf32>
    %371 = vector.broadcast %369 : vector<4x1xf32> to vector<4x256xf32>
    %372 = vector.broadcast %370 : vector<1x256xf32> to vector<4x256xf32>
    %373 = arith.mulf %371, %372 : vector<4x256xf32>
    %374 = arith.addf %368, %373 : vector<4x256xf32>
    %c0_79 = arith.constant 0 : index
    %c55 = arith.constant 55 : index
    %375 = vector.load %arg8[%c0_79, %c55] : memref<4x64xf32, #tpu.memory_space<vmem>>, vector<4x1xf32>
    %376 = vector.extract_strided_slice %42 {offsets = [55, 0], sizes = [1, 256], strides = [1, 1]} : vector<64x256xf32> to vector<1x256xf32>
    %377 = vector.broadcast %375 : vector<4x1xf32> to vector<4x256xf32>
    %378 = vector.broadcast %376 : vector<1x256xf32> to vector<4x256xf32>
    %379 = arith.mulf %377, %378 : vector<4x256xf32>
    %380 = arith.addf %374, %379 : vector<4x256xf32>
    %c0_80 = arith.constant 0 : index
    %c56 = arith.constant 56 : index
    %381 = vector.load %arg8[%c0_80, %c56] : memref<4x64xf32, #tpu.memory_space<vmem>>, vector<4x1xf32>
    %382 = vector.extract_strided_slice %42 {offsets = [56, 0], sizes = [1, 256], strides = [1, 1]} : vector<64x256xf32> to vector<1x256xf32>
    %383 = vector.broadcast %381 : vector<4x1xf32> to vector<4x256xf32>
    %384 = vector.broadcast %382 : vector<1x256xf32> to vector<4x256xf32>
    %385 = arith.mulf %383, %384 : vector<4x256xf32>
    %386 = arith.addf %380, %385 : vector<4x256xf32>
    %c0_81 = arith.constant 0 : index
    %c57 = arith.constant 57 : index
    %387 = vector.load %arg8[%c0_81, %c57] : memref<4x64xf32, #tpu.memory_space<vmem>>, vector<4x1xf32>
    %388 = vector.extract_strided_slice %42 {offsets = [57, 0], sizes = [1, 256], strides = [1, 1]} : vector<64x256xf32> to vector<1x256xf32>
    %389 = vector.broadcast %387 : vector<4x1xf32> to vector<4x256xf32>
    %390 = vector.broadcast %388 : vector<1x256xf32> to vector<4x256xf32>
    %391 = arith.mulf %389, %390 : vector<4x256xf32>
    %392 = arith.addf %386, %391 : vector<4x256xf32>
    %c0_82 = arith.constant 0 : index
    %c58 = arith.constant 58 : index
    %393 = vector.load %arg8[%c0_82, %c58] : memref<4x64xf32, #tpu.memory_space<vmem>>, vector<4x1xf32>
    %394 = vector.extract_strided_slice %42 {offsets = [58, 0], sizes = [1, 256], strides = [1, 1]} : vector<64x256xf32> to vector<1x256xf32>
    %395 = vector.broadcast %393 : vector<4x1xf32> to vector<4x256xf32>
    %396 = vector.broadcast %394 : vector<1x256xf32> to vector<4x256xf32>
    %397 = arith.mulf %395, %396 : vector<4x256xf32>
    %398 = arith.addf %392, %397 : vector<4x256xf32>
    %c0_83 = arith.constant 0 : index
    %c59 = arith.constant 59 : index
    %399 = vector.load %arg8[%c0_83, %c59] : memref<4x64xf32, #tpu.memory_space<vmem>>, vector<4x1xf32>
    %400 = vector.extract_strided_slice %42 {offsets = [59, 0], sizes = [1, 256], strides = [1, 1]} : vector<64x256xf32> to vector<1x256xf32>
    %401 = vector.broadcast %399 : vector<4x1xf32> to vector<4x256xf32>
    %402 = vector.broadcast %400 : vector<1x256xf32> to vector<4x256xf32>
    %403 = arith.mulf %401, %402 : vector<4x256xf32>
    %404 = arith.addf %398, %403 : vector<4x256xf32>
    %c0_84 = arith.constant 0 : index
    %c60 = arith.constant 60 : index
    %405 = vector.load %arg8[%c0_84, %c60] : memref<4x64xf32, #tpu.memory_space<vmem>>, vector<4x1xf32>
    %406 = vector.extract_strided_slice %42 {offsets = [60, 0], sizes = [1, 256], strides = [1, 1]} : vector<64x256xf32> to vector<1x256xf32>
    %407 = vector.broadcast %405 : vector<4x1xf32> to vector<4x256xf32>
    %408 = vector.broadcast %406 : vector<1x256xf32> to vector<4x256xf32>
    %409 = arith.mulf %407, %408 : vector<4x256xf32>
    %410 = arith.addf %404, %409 : vector<4x256xf32>
    %c0_85 = arith.constant 0 : index
    %c61 = arith.constant 61 : index
    %411 = vector.load %arg8[%c0_85, %c61] : memref<4x64xf32, #tpu.memory_space<vmem>>, vector<4x1xf32>
    %412 = vector.extract_strided_slice %42 {offsets = [61, 0], sizes = [1, 256], strides = [1, 1]} : vector<64x256xf32> to vector<1x256xf32>
    %413 = vector.broadcast %411 : vector<4x1xf32> to vector<4x256xf32>
    %414 = vector.broadcast %412 : vector<1x256xf32> to vector<4x256xf32>
    %415 = arith.mulf %413, %414 : vector<4x256xf32>
    %416 = arith.addf %410, %415 : vector<4x256xf32>
    %c0_86 = arith.constant 0 : index
    %c62 = arith.constant 62 : index
    %417 = vector.load %arg8[%c0_86, %c62] : memref<4x64xf32, #tpu.memory_space<vmem>>, vector<4x1xf32>
    %418 = vector.extract_strided_slice %42 {offsets = [62, 0], sizes = [1, 256], strides = [1, 1]} : vector<64x256xf32> to vector<1x256xf32>
    %419 = vector.broadcast %417 : vector<4x1xf32> to vector<4x256xf32>
    %420 = vector.broadcast %418 : vector<1x256xf32> to vector<4x256xf32>
    %421 = arith.mulf %419, %420 : vector<4x256xf32>
    %422 = arith.addf %416, %421 : vector<4x256xf32>
    %c0_87 = arith.constant 0 : index
    %c63 = arith.constant 63 : index
    %423 = vector.load %arg8[%c0_87, %c63] : memref<4x64xf32, #tpu.memory_space<vmem>>, vector<4x1xf32>
    %424 = vector.extract_strided_slice %42 {offsets = [63, 0], sizes = [1, 256], strides = [1, 1]} : vector<64x256xf32> to vector<1x256xf32>
    %425 = vector.broadcast %423 : vector<4x1xf32> to vector<4x256xf32>
    %426 = vector.broadcast %424 : vector<1x256xf32> to vector<4x256xf32>
    %427 = arith.mulf %425, %426 : vector<4x256xf32>
    %428 = arith.addf %422, %427 : vector<4x256xf32>
    %c0_88 = arith.constant 0 : index
    %c0_89 = arith.constant 0 : index
    %429 = vector.load %arg10[%c0_88, %c0_89] : memref<4x256xf32, #tpu.memory_space<vmem>>, vector<4x256xf32>
    tpu.vector_store %arg10[%c0_88, %c0_89], %428 {strides = array<i32>} : memref<4x256xf32, #tpu.memory_space<vmem>>, vector<4x256xf32>,
    return
  }
  func.func @transform_0(%arg0: i32) -> (i32, i32) {
    %c0_i32 = arith.constant 0 : i32
    %c0_i32_0 = arith.constant 0 : i32
    return %c0_i32, %arg0 : i32, i32
  }
  func.func @transform_1(%arg0: i32) -> (i32, i32) {
    %c0_i32 = arith.constant 0 : i32
    %c0_i32_0 = arith.constant 0 : i32
    return %c0_i32, %arg0 : i32, i32
  }
  func.func @transform_2(%arg0: i32) -> (i32, i32) {
    %c0_i32 = arith.constant 0 : i32
    %c0_i32_0 = arith.constant 0 : i32
    %c0_i32_1 = arith.constant 0 : i32
    return %c0_i32, %c0_i32_0 : i32, i32
  }
  func.func @transform_3(%arg0: i32) -> (i32, i32) {
    %c0_i32 = arith.constant 0 : i32
    %c0_i32_0 = arith.constant 0 : i32
    %c0_i32_1 = arith.constant 0 : i32
    return %c0_i32, %c0_i32_0 : i32, i32
  }
  func.func @transform_4(%arg0: i32) -> (i32, i32) {
    %c0_i32 = arith.constant 0 : i32
    %c0_i32_0 = arith.constant 0 : i32
    %c0_i32_1 = arith.constant 0 : i32
    return %c0_i32, %c0_i32_0 : i32, i32
  }
  func.func @transform_5(%arg0: i32) -> (i32, i32) {
    %c0_i32 = arith.constant 0 : i32
    %c0_i32_0 = arith.constant 0 : i32
    %c0_i32_1 = arith.constant 0 : i32
    return %c0_i32, %c0_i32_0 : i32, i32
  }
  func.func @transform_6(%arg0: i32) -> (i32, i32) {
    %c0_i32 = arith.constant 0 : i32
    %c0_i32_0 = arith.constant 0 : i32
    %c0_i32_1 = arith.constant 0 : i32
    return %c0_i32, %c0_i32_0 : i32, i32
  }
  func.func @transform_7(%arg0: i32) -> (i32, i32) {
    %c0_i32 = arith.constant 0 : i32
    %c0_i32_0 = arith.constant 0 : i32
    %c0_i32_1 = arith.constant 0 : i32
    return %c0_i32, %c0_i32_0 : i32, i32
  }
  func.func @transform_8(%arg0: i32) -> (i32, i32) {
    %c0_i32 = arith.constant 0 : i32
    %c0_i32_0 = arith.constant 0 : i32
    %c0_i32_1 = arith.constant 0 : i32
    return %c0_i32, %c0_i32_0 : i32, i32
  }
  func.func @transform_9(%arg0: i32) -> (i32, i32) {
    %c0_i32 = arith.constant 0 : i32
    %c0_i32_0 = arith.constant 0 : i32
    return %c0_i32, %arg0 : i32, i32
  }
}

</mosaic_0001>

<llo_original>
// kernel: subnet_forward.1
$region0: #{subnet_forward.1}
  #allocation0 [shape = 'u32[]', space=smem, size = 0x4, offset = 0x4, fixed_abs, tag = 'smem constant byte address 0x4 - core index']
  #allocation1 [shape = 'u32[72,128]{1,0:T(1,128)}', space=vmem, size = 0x9000, scoped, tag = 'internal scratch']
  %s0 = inlined_call_operand.vmem [shape: f32[1,512], index: 0, kind: input, shape index: {}]
  %s1 = inlined_call_operand.vmem [shape: f32[4,512], index: 1, kind: input, shape index: {}]
  %s2 = inlined_call_operand.vmem [shape: f32[64,4], index: 2, kind: input, shape index: {}]
  %s3 = inlined_call_operand.vmem [shape: f32[64,1], index: 3, kind: input, shape index: {}]
  %s4 = inlined_call_operand.vmem [shape: f32[64,1], index: 4, kind: input, shape index: {}]
  %s5 = inlined_call_operand.vmem [shape: bf16[64,64], index: 5, kind: input, shape index: {}]
  %s6 = inlined_call_operand.vmem [shape: f32[64,1], index: 6, kind: input, shape index: {}]
  %s7 = inlined_call_operand.vmem [shape: f32[4,64], index: 7, kind: input, shape index: {}]
  %s8 = inlined_call_operand.vmem [shape: f32[4,1], index: 8, kind: input, shape index: {}]
  %s9 = inlined_call_operand.vmem [shape: f32[4,512], index: 9, kind: output, shape index: {}]
  %s10 = sld [smem:[#allocation0]]
  $region69: #{subnet_forward.1} parent=0
    _
  %s12 = ssub.s32 1, %s10
  %s13 = scalar_select 0, %s12, %s10
  loop: start=0, step=1, limit=4
  $region2: #{subnet_forward.1} parent=0 // loop_pre_header
    _
  $region3: #{subnet_forward.1} parent=0 // loop_header
    %s15 = sphi 0, %s19
    %p16 = scmp.ge.s32.totalorder %s15, 4
    %s25 = sphi 0, %s27
    %s28 = sphi 0, %s25
    %s29 = sphi 0, %s28
    %s45 = sphi 0, %s29
    %s51 = sphi 0, %s53
    %s54 = sphi 0, %s51
    %s55 = sphi 0, %s54
    %s71 = sphi 0, %s55
    %s75 = sphi 0, %s75
    %s77 = sphi 0, %s75
    %s78 = sphi 0, %s77
    %s92 = sphi 0, %s78
    %s96 = sphi 0, %s96
    %s98 = sphi 0, %s96
    %s99 = sphi 0, %s98
    %s113 = sphi 0, %s99
    %s117 = sphi 0, %s117
    %s119 = sphi 0, %s117
    %s120 = sphi 0, %s119
    %s134 = sphi 0, %s120
    %s138 = sphi 0, %s138
    %s140 = sphi 0, %s138
    %s141 = sphi 0, %s140
    %s155 = sphi 0, %s141
    %s159 = sphi 0, %s159
    %s161 = sphi 0, %s159
    %s162 = sphi 0, %s161
    %s176 = sphi 0, %s162
    %s180 = sphi 0, %s180
    %s182 = sphi 0, %s180
    %s183 = sphi 0, %s182
    %s197 = sphi 0, %s183
    %s201 = sphi 0, %s201
    %s203 = sphi 0, %s201
    %s204 = sphi 0, %s203
    %s218 = sphi 0, %s204
    %s224 = sphi 0, %s226
    %s227 = sphi 0, %s224
    %s228 = sphi 0, %s227
    %s244 = sphi 0, %s228
  $region4: #{subnet_forward.1} parent=0 // loop_header_branch
    %18 = sbr.rel (%p16) target = $region8
  $region5: #{subnet_forward.1} parent=0 // loop_body
    %s20 = ssub.s32 %s15, 1
    %s21 = ssub.s32 %s15, 2
    %s22 = sadd.s32 %s15, 1
    %s23 = ssub.s32 %s15, %s22
    %p24 = scmp.eq.s32.totalorder %s23, 0
    %s26 = sadd.s32 %s25, 1
    %s27 = scalar_select %p24, %s25, %s26
    %p30 = pneg %p24
    %p31 = scmp.eq.s32.totalorder %s15, 1
    %p32 = por %p30, %p31
    %p33 = scmp.ne.s32.totalorder %s25, %s28
    %p34 = scmp.eq.s32.totalorder %s15, 0
    %p35 = por %p33, %p34
    %p36 = scmp.ne.s32.totalorder %s25, %s28
    %p37 = scmp.eq.s32.totalorder %s20, 1
    %p38 = por %p36, %p37
    %p39 = scmp.ne.s32.totalorder %s28, %s29
    %p40 = scmp.eq.s32.totalorder %s20, 0
    %p41 = por %p39, %p40
    %p42 = scmp.ne.s32.totalorder %s28, %s29
    %p43 = scmp.eq.s32.totalorder %s21, 1
    %p44 = por %p42, %p43
    %p46 = scmp.ne.s32.totalorder %s29, %s45
    %p47 = scmp.eq.s32.totalorder %s21, 0
    %p48 = por %p46, %p47
    %s49 = ssub.s32 %s15, %s22
    %p50 = scmp.eq.s32.totalorder %s49, 0
    %s52 = sadd.s32 %s51, 1
    %s53 = scalar_select %p50, %s51, %s52
    %p56 = pneg %p50
    %p57 = scmp.eq.s32.totalorder %s15, 1
    %p58 = por %p56, %p57
    %p59 = scmp.ne.s32.totalorder %s51, %s54
    %p60 = scmp.eq.s32.totalorder %s15, 0
    %p61 = por %p59, %p60
    %p62 = scmp.ne.s32.totalorder %s51, %s54
    %p63 = scmp.eq.s32.totalorder %s20, 1
    %p64 = por %p62, %p63
    %p65 = scmp.ne.s32.totalorder %s54, %s55
    %p66 = scmp.eq.s32.totalorder %s20, 0
    %p67 = por %p65, %p66
    %p68 = scmp.ne.s32.totalorder %s54, %s55
    %p69 = scmp.eq.s32.totalorder %s21, 1
    %p70 = por %p68, %p69
    %p72 = scmp.ne.s32.totalorder %s55, %s71
    %p73 = scmp.eq.s32.totalorder %s21, 0
    %p74 = por %p72, %p73
    %s76 = sadd.s32 %s75, 1
    %p79 = scmp.eq.s32.totalorder %s15, 1
    %p80 = scmp.ne.s32.totalorder %s75, %s77
    %p81 = scmp.eq.s32.totalorder %s15, 0
    %p82 = por %p80, %p81
    %p83 = scmp.ne.s32.totalorder %s75, %s77
    %p84 = scmp.eq.s32.totalorder %s20, 1
    %p85 = por %p83, %p84
    %p86 = scmp.ne.s32.totalorder %s77, %s78
    %p87 = scmp.eq.s32.totalorder %s20, 0
    %p88 = por %p86, %p87
    %p89 = scmp.ne.s32.totalorder %s77, %s78
    %p90 = scmp.eq.s32.totalorder %s21, 1
    %p91 = por %p89, %p90
    %p93 = scmp.ne.s32.totalorder %s78, %s92
    %p94 = scmp.eq.s32.totalorder %s21, 0
    %p95 = por %p93, %p94
    %s97 = sadd.s32 %s96, 1
    %p100 = scmp.eq.s32.totalorder %s15, 1
    %p101 = scmp.ne.s32.totalorder %s96, %s98
    %p102 = scmp.eq.s32.totalorder %s15, 0
    %p103 = por %p101, %p102
    %p104 = scmp.ne.s32.totalorder %s96, %s98
    %p105 = scmp.eq.s32.totalorder %s20, 1
    %p106 = por %p104, %p105
    %p107 = scmp.ne.s32.totalorder %s98, %s99
    %p108 = scmp.eq.s32.totalorder %s20, 0
    %p109 = por %p107, %p108
    %p110 = scmp.ne.s32.totalorder %s98, %s99
    %p111 = scmp.eq.s32.totalorder %s21, 1
    %p112 = por %p110, %p111
    %p114 = scmp.ne.s32.totalorder %s99, %s113
    %p115 = scmp.eq.s32.totalorder %s21, 0
    %p116 = por %p114, %p115
    %s118 = sadd.s32 %s117, 1
    %p121 = scmp.eq.s32.totalorder %s15, 1
    %p122 = scmp.ne.s32.totalorder %s117, %s119
    %p123 = scmp.eq.s32.totalorder %s15, 0
    %p124 = por %p122, %p123
    %p125 = scmp.ne.s32.totalorder %s117, %s119
    %p126 = scmp.eq.s32.totalorder %s20, 1
    %p127 = por %p125, %p126
    %p128 = scmp.ne.s32.totalorder %s119, %s120
    %p129 = scmp.eq.s32.totalorder %s20, 0
    %p130 = por %p128, %p129
    %p131 = scmp.ne.s32.totalorder %s119, %s120
    %p132 = scmp.eq.s32.totalorder %s21, 1
    %p133 = por %p131, %p132
    %p135 = scmp.ne.s32.totalorder %s120, %s134
    %p136 = scmp.eq.s32.totalorder %s21, 0
    %p137 = por %p135, %p136
    %s139 = sadd.s32 %s138, 1
    %p142 = scmp.eq.s32.totalorder %s15, 1
    %p143 = scmp.ne.s32.totalorder %s138, %s140
    %p144 = scmp.eq.s32.totalorder %s15, 0
    %p145 = por %p143, %p144
    %p146 = scmp.ne.s32.totalorder %s138, %s140
    %p147 = scmp.eq.s32.totalorder %s20, 1
    %p148 = por %p146, %p147
    %p149 = scmp.ne.s32.totalorder %s140, %s141
    %p150 = scmp.eq.s32.totalorder %s20, 0
    %p151 = por %p149, %p150
    %p152 = scmp.ne.s32.totalorder %s140, %s141
    %p153 = scmp.eq.s32.totalorder %s21, 1
    %p154 = por %p152, %p153
    %p156 = scmp.ne.s32.totalorder %s141, %s155
    %p157 = scmp.eq.s32.totalorder %s21, 0
    %p158 = por %p156, %p157
    %s160 = sadd.s32 %s159, 1
    %p163 = scmp.eq.s32.totalorder %s15, 1
    %p164 = scmp.ne.s32.totalorder %s159, %s161
    %p165 = scmp.eq.s32.totalorder %s15, 0
    %p166 = por %p164, %p165
    %p167 = scmp.ne.s32.totalorder %s159, %s161
    %p168 = scmp.eq.s32.totalorder %s20, 1
    %p169 = por %p167, %p168
    %p170 = scmp.ne.s32.totalorder %s161, %s162
    %p171 = scmp.eq.s32.totalorder %s20, 0
    %p172 = por %p170, %p171
    %p173 = scmp.ne.s32.totalorder %s161, %s162
    %p174 = scmp.eq.s32.totalorder %s21, 1
    %p175 = por %p173, %p174
    %p177 = scmp.ne.s32.totalorder %s162, %s176
    %p178 = scmp.eq.s32.totalorder %s21, 0
    %p179 = por %p177, %p178
    %s181 = sadd.s32 %s180, 1
    %p184 = scmp.eq.s32.totalorder %s15, 1
    %p185 = scmp.ne.s32.totalorder %s180, %s182
    %p186 = scmp.eq.s32.totalorder %s15, 0
    %p187 = por %p185, %p186
    %p188 = scmp.ne.s32.totalorder %s180, %s182
    %p189 = scmp.eq.s32.totalorder %s20, 1
    %p190 = por %p188, %p189
    %p191 = scmp.ne.s32.totalorder %s182, %s183
    %p192 = scmp.eq.s32.totalorder %s20, 0
    %p193 = por %p191, %p192
    %p194 = scmp.ne.s32.totalorder %s182, %s183
    %p195 = scmp.eq.s32.totalorder %s21, 1
    %p196 = por %p194, %p195
    %p198 = scmp.ne.s32.totalorder %s183, %s197
    %p199 = scmp.eq.s32.totalorder %s21, 0
    %p200 = por %p198, %p199
    %s202 = sadd.s32 %s201, 1
    %p205 = scmp.eq.s32.totalorder %s15, 1
    %p206 = scmp.ne.s32.totalorder %s201, %s203
    %p207 = scmp.eq.s32.totalorder %s15, 0
    %p208 = por %p206, %p207
    %p209 = scmp.ne.s32.totalorder %s201, %s203
    %p210 = scmp.eq.s32.totalorder %s20, 1
    %p211 = por %p209, %p210
    %p212 = scmp.ne.s32.totalorder %s203, %s204
    %p213 = scmp.eq.s32.totalorder %s20, 0
    %p214 = por %p212, %p213
    %p215 = scmp.ne.s32.totalorder %s203, %s204
    %p216 = scmp.eq.s32.totalorder %s21, 1
    %p217 = por %p215, %p216
    %p219 = scmp.ne.s32.totalorder %s204, %s218
    %p220 = scmp.eq.s32.totalorder %s21, 0
    %p221 = por %p219, %p220
    %s222 = ssub.s32 %s15, %s22
    %p223 = scmp.eq.s32.totalorder %s222, 0
    %s225 = sadd.s32 %s224, 1
    %s226 = scalar_select %p223, %s224, %s225
    %p229 = pneg %p223
    %p230 = scmp.eq.s32.totalorder %s15, 1
    %p231 = por %p229, %p230
    %p232 = scmp.ne.s32.totalorder %s224, %s227
    %p233 = scmp.eq.s32.totalorder %s15, 0
    %p234 = por %p232, %p233
    %p235 = scmp.ne.s32.totalorder %s224, %s227
    %p236 = scmp.eq.s32.totalorder %s20, 1
    %p237 = por %p235, %p236
    %p238 = scmp.ne.s32.totalorder %s227, %s228
    %p239 = scmp.eq.s32.totalorder %s20, 0
    %p240 = por %p238, %p239
    %p241 = scmp.ne.s32.totalorder %s227, %s228
    %p242 = scmp.eq.s32.totalorder %s21, 1
    %p243 = por %p241, %p242
    %p245 = scmp.ne.s32.totalorder %s228, %s244
    %p246 = scmp.eq.s32.totalorder %s21, 0
    %p247 = por %p245, %p246
    %p248 = scmp.le.s32.totalorder 1, %s15
    %p249 = scmp.lt.s32.totalorder %s15, 3
    %p250 = pnand %p248, %p249
    %p251 = pneg %p250
    // Predicated region
    $region9: #{subnet_forward.1} parent=5 // pred_check
      _
    $region10: #{subnet_forward.1} parent=5 // pred_check_branch
      %253 = sbr.rel (%p250) target = $region12
    $region11: #{subnet_forward.1} parent=5 // pred_region
      %s254 = ssub.s32 %s15, 1
      // Predicated region
      $region13: #{subnet_forward.1} parent=11 // pred_check
        %p255 = pneg %p88
      $region14: #{subnet_forward.1} parent=11 // pred_check_branch
        %257 = sbr.rel (%p255) target = $region16
      $region15: #{subnet_forward.1} parent=11 // pred_region
        _
      $region16: #{subnet_forward.1} parent=11 // pred_fallthru
        _
      // Predicated region
      $region17: #{subnet_forward.1} parent=11 // pred_check
        %p258 = pneg %p109
      $region18: #{subnet_forward.1} parent=11 // pred_check_branch
        %260 = sbr.rel (%p258) target = $region20
      $region19: #{subnet_forward.1} parent=11 // pred_region
        _
      $region20: #{subnet_forward.1} parent=11 // pred_fallthru
        _
      // Predicated region
      $region21: #{subnet_forward.1} parent=11 // pred_check
        %p261 = pneg %p130
      $region22: #{subnet_forward.1} parent=11 // pred_check_branch
        %263 = sbr.rel (%p261) target = $region24
      $region23: #{subnet_forward.1} parent=11 // pred_region
        _
      $region24: #{subnet_forward.1} parent=11 // pred_fallthru
        _
      // Predicated region
      $region25: #{subnet_forward.1} parent=11 // pred_check
        %p264 = pneg %p151
      $region26: #{subnet_forward.1} parent=11 // pred_check_branch
        %266 = sbr.rel (%p264) target = $region28
      $region27: #{subnet_forward.1} parent=11 // pred_region
        _
      $region28: #{subnet_forward.1} parent=11 // pred_fallthru
        _
      // Predicated region
      $region29: #{subnet_forward.1} parent=11 // pred_check
        %p267 = pneg %p172
      $region30: #{subnet_forward.1} parent=11 // pred_check_branch
        %269 = sbr.rel (%p267) target = $region32
      $region31: #{subnet_forward.1} parent=11 // pred_region
        _
      $region32: #{subnet_forward.1} parent=11 // pred_fallthru
        _
      // Predicated region
      $region33: #{subnet_forward.1} parent=11 // pred_check
        %p270 = pneg %p193
      $region34: #{subnet_forward.1} parent=11 // pred_check_branch
        %272 = sbr.rel (%p270) target = $region36
      $region35: #{subnet_forward.1} parent=11 // pred_region
        _
      $region36: #{subnet_forward.1} parent=11 // pred_fallthru
        _
      // Predicated region
      $region37: #{subnet_forward.1} parent=11 // pred_check
        %p273 = pneg %p214
      $region38: #{subnet_forward.1} parent=11 // pred_check_branch
        %275 = sbr.rel (%p273) target = $region40
      $region39: #{subnet_forward.1} parent=11 // pred_region
        _
      $region40: #{subnet_forward.1} parent=11 // pred_fallthru
        _
    $region12: #{subnet_forward.1} parent=5 // pred_fallthru
      _
    %p276 = scmp.lt.s32.totalorder %s15, 2
    // Predicated region
    $region41: #{subnet_forward.1} parent=5 // pred_check
      %p277 = pneg %p276
    $region42: #{subnet_forward.1} parent=5 // pred_check_branch
      %279 = sbr.rel (%p277) target = $region44
    $region43: #{subnet_forward.1} parent=5 // pred_region
      // Predicated region
      $region45: #{subnet_forward.1} parent=43 // pred_check
        %p280 = pneg %p35
      $region46: #{subnet_forward.1} parent=43 // pred_check_branch
        %282 = sbr.rel (%p280) target = $region48
      $region47: #{subnet_forward.1} parent=43 // pred_region
        %s283 = smul.u32 2, %s15
        %p284 = scmp.lt.s32.totalorder %s283, 3
        %s285 = scalar_select %p284, %s283, 3
        %s286 = scalar_lea.vmem %s0, %s285
        %s287 = smul.u32 2, %s15
      $region48: #{subnet_forward.1} parent=43 // pred_fallthru
        _
      // Predicated region
      $region49: #{subnet_forward.1} parent=43 // pred_check
        %p288 = pneg %p61
      $region50: #{subnet_forward.1} parent=43 // pred_check_branch
        %290 = sbr.rel (%p288) target = $region52
      $region51: #{subnet_forward.1} parent=43 // pred_region
        %s291 = smul.u32 2, %s15
        %p292 = scmp.lt.s32.totalorder %s291, 3
        %s293 = scalar_select %p292, %s291, 3
        %s294 = smul.addr %s293, 4
        %s295 = scalar_lea.vmem %s1, %s294
        %s296 = smul.u32 2, %s15
      $region52: #{subnet_forward.1} parent=43 // pred_fallthru
        _
    $region44: #{subnet_forward.1} parent=5 // pred_fallthru
      _
    %p297 = scmp.le.s32.totalorder 1, %s15
    %p298 = scmp.lt.s32.totalorder %s15, 3
    %p299 = pnand %p297, %p298
    %p300 = pneg %p299
    // Predicated region
    $region53: #{subnet_forward.1} parent=5 // pred_check
      _
    $region54: #{subnet_forward.1} parent=5 // pred_check_branch
      %302 = sbr.rel (%p299) target = $region56
    $region55: #{subnet_forward.1} parent=5 // pred_region
      %s303 = ssub.s32 %s15, 1
      %s304 = smul.u32 2, %s20
      %p305 = scmp.lt.s32.totalorder %s304, 3
      %s306 = scalar_select %p305, %s304, 3
      %s307 = scalar_lea.vmem %s0, %s306
      %p308 = pneg %p41
      %p309 = pneg %p38
      %s310 = smul.u32 2, %s20
      %p311 = scmp.lt.s32.totalorder %s310, 3
      %s312 = scalar_select %p311, %s310, 3
      %s313 = smul.addr %s312, 4
      %s314 = scalar_lea.vmem %s1, %s313
      %p315 = pneg %p67
      %p316 = pneg %p64
      %p317 = pneg %p88
      %p318 = pneg %p85
      %p319 = pneg %p109
      %p320 = pneg %p106
      %p321 = pneg %p130
      %p322 = pneg %p127
      %p323 = pneg %p151
      %p324 = pneg %p148
      %p325 = pneg %p172
      %p326 = pneg %p169
      %p327 = pneg %p193
      %p328 = pneg %p190
      %p329 = pneg %p214
      %p330 = pneg %p211
      %p331 = pneg %p240
      %p332 = pneg %p237
      %s333 = smul.u32 2, %s20
      %p334 = scmp.lt.s32.totalorder %s333, 3
      %s335 = scalar_select %p334, %s333, 3
      %s336 = smul.addr %s335, 4
      %s337 = scalar_lea.vmem %s9, %s336
      %s338 = smul.u32 2, %s20
      %p339 = scmp.lt.s32.totalorder %s338, 3
      %s340 = scalar_select %p339, %s338, 3
      %s341 = scalar_lea.vmem %s0, %s340
      %s342 = smul.u32 2, %s20
      %s343 = smul.u32 2, %s20
      %p344 = scmp.lt.s32.totalorder %s343, 3
      %s345 = scalar_select %p344, %s343, 3
      %s346 = smul.addr %s345, 4
      %s347 = scalar_lea.vmem %s1, %s346
      %s348 = smul.u32 2, %s20
      %s349 = smul.u32 2, %s20
      %p350 = scmp.lt.s32.totalorder %s349, 3
      %s351 = scalar_select %p350, %s349, 3
      %s352 = smul.addr %s351, 4
      %s353 = scalar_lea.vmem %s9, %s352
      %s354 = smul.u32 2, %s20
      %v356 = vld [vmem:[%s347] sm:$0xff]
      %v357 = vld [vmem:[%s341] sm:$0x3]
      %v358 = vld [vmem:[%s3] sm:$0xff]
      %v359 = vld [vmem:[%s3 + $0x8] sm:$0xff]
      %v360 = vld [vmem:[%s3 + $0x10] sm:$0xff]
      %v361 = vld [vmem:[%s3 + $0x18] sm:$0xff]
      %v362 = vld [vmem:[%s3 + $0x20] sm:$0xff]
      %v363 = vld [vmem:[%s3 + $0x28] sm:$0xff]
      %v364 = vld [vmem:[%s3 + $0x30] sm:$0xff]
      %v365 = vld [vmem:[%s3 + $0x38] sm:$0xff]
      %367 = vset.pattern.permute.xlu0 0
      %368 = vperm.xlu0 %367, %v358
      %v369 = vpop.permute.xlu0 %368
      %372 = vset.pattern.permute.xlu0 0
      %373 = vperm.xlu0 %372, %v359
      %v374 = vpop.permute.xlu0 %373
      %377 = vset.pattern.permute.xlu0 0
      %378 = vperm.xlu0 %377, %v360
      %v379 = vpop.permute.xlu0 %378
      %382 = vset.pattern.permute.xlu0 0
      %383 = vperm.xlu0 %382, %v361
      %v384 = vpop.permute.xlu0 %383
      %387 = vset.pattern.permute.xlu0 0
      %388 = vperm.xlu0 %387, %v362
      %v389 = vpop.permute.xlu0 %388
      %392 = vset.pattern.permute.xlu0 0
      %393 = vperm.xlu0 %392, %v363
      %v394 = vpop.permute.xlu0 %393
      %397 = vset.pattern.permute.xlu0 0
      %398 = vperm.xlu0 %397, %v364
      %v399 = vpop.permute.xlu0 %398
      %402 = vset.pattern.permute.xlu0 0
      %403 = vperm.xlu0 %402, %v365
      %v404 = vpop.permute.xlu0 %403
      %v407 = vperm.slane %v357, 0
      %v408 = vperm.slane %v357, 1
      %v411 = vmul.f32 %v369, %v407
      %v412 = vmul.f32 %v369, %v408
      %v413 = vmul.f32 %v374, %v407
      %v414 = vmul.f32 %v374, %v408
      %v415 = vmul.f32 %v379, %v407
      %v416 = vmul.f32 %v379, %v408
      %v417 = vmul.f32 %v384, %v407
      %v418 = vmul.f32 %v384, %v408
      %v419 = vmul.f32 %v389, %v407
      %v420 = vmul.f32 %v389, %v408
      %v421 = vmul.f32 %v394, %v407
      %v422 = vmul.f32 %v394, %v408
      %v423 = vmul.f32 %v399, %v407
      %v424 = vmul.f32 %v399, %v408
      %v425 = vmul.f32 %v404, %v407
      %v426 = vmul.f32 %v404, %v408
      %v427 = vld [vmem:[%s4] sm:$0xff]
      %v428 = vld [vmem:[%s4 + $0x8] sm:$0xff]
      %v429 = vld [vmem:[%s4 + $0x10] sm:$0xff]
      %v430 = vld [vmem:[%s4 + $0x18] sm:$0xff]
      %v431 = vld [vmem:[%s4 + $0x20] sm:$0xff]
      %v432 = vld [vmem:[%s4 + $0x28] sm:$0xff]
      %v433 = vld [vmem:[%s4 + $0x30] sm:$0xff]
      %v434 = vld [vmem:[%s4 + $0x38] sm:$0xff]
      %436 = vset.pattern.permute.xlu0 0
      %437 = vperm.xlu0 %436, %v427
      %v438 = vpop.permute.xlu0 %437
      %441 = vset.pattern.permute.xlu0 0
      %442 = vperm.xlu0 %441, %v428
      %v443 = vpop.permute.xlu0 %442
      %446 = vset.pattern.permute.xlu0 0
      %447 = vperm.xlu0 %446, %v429
      %v448 = vpop.permute.xlu0 %447
      %451 = vset.pattern.permute.xlu0 0
      %452 = vperm.xlu0 %451, %v430
      %v453 = vpop.permute.xlu0 %452
      %456 = vset.pattern.permute.xlu0 0
      %457 = vperm.xlu0 %456, %v431
      %v458 = vpop.permute.xlu0 %457
      %461 = vset.pattern.permute.xlu0 0
      %462 = vperm.xlu0 %461, %v432
      %v463 = vpop.permute.xlu0 %462
      %466 = vset.pattern.permute.xlu0 0
      %467 = vperm.xlu0 %466, %v433
      %v468 = vpop.permute.xlu0 %467
      %471 = vset.pattern.permute.xlu0 0
      %472 = vperm.xlu0 %471, %v434
      %v473 = vpop.permute.xlu0 %472
      %v475 = vadd.f32 %v411, %v438
      %v476 = vadd.f32 %v412, %v438
      %v477 = vadd.f32 %v413, %v443
      %v478 = vadd.f32 %v414, %v443
      %v479 = vadd.f32 %v415, %v448
      %v480 = vadd.f32 %v416, %v448
      %v481 = vadd.f32 %v417, %v453
      %v482 = vadd.f32 %v418, %v453
      %v483 = vadd.f32 %v419, %v458
      %v484 = vadd.f32 %v420, %v458
      %v485 = vadd.f32 %v421, %v463
      %v486 = vadd.f32 %v422, %v463
      %v487 = vadd.f32 %v423, %v468
      %v488 = vadd.f32 %v424, %v468
      %v489 = vadd.f32 %v425, %v473
      %v490 = vadd.f32 %v426, %v473
      %v491 = vld [vmem:[%s2] sm:$0xff]
      %v492 = vld [vmem:[%s2 + $0x8] sm:$0xff]
      %v493 = vld [vmem:[%s2 + $0x10] sm:$0xff]
      %v494 = vld [vmem:[%s2 + $0x18] sm:$0xff]
      %v495 = vld [vmem:[%s2 + $0x20] sm:$0xff]
      %v496 = vld [vmem:[%s2 + $0x28] sm:$0xff]
      %v497 = vld [vmem:[%s2 + $0x30] sm:$0xff]
      %v498 = vld [vmem:[%s2 + $0x38] sm:$0xff]
      %500 = vset.pattern.permute.xlu0 0
      %501 = vperm.xlu0 %500, %v491
      %v502 = vpop.permute.xlu0 %501
      %505 = vset.pattern.permute.xlu0 0
      %506 = vperm.xlu0 %505, %v492
      %v507 = vpop.permute.xlu0 %506
      %510 = vset.pattern.permute.xlu0 0
      %511 = vperm.xlu0 %510, %v493
      %v512 = vpop.permute.xlu0 %511
      %515 = vset.pattern.permute.xlu0 0
      %516 = vperm.xlu0 %515, %v494
      %v517 = vpop.permute.xlu0 %516
      %520 = vset.pattern.permute.xlu0 0
      %521 = vperm.xlu0 %520, %v495
      %v522 = vpop.permute.xlu0 %521
      %525 = vset.pattern.permute.xlu0 0
      %526 = vperm.xlu0 %525, %v496
      %v527 = vpop.permute.xlu0 %526
      %530 = vset.pattern.permute.xlu0 0
      %531 = vperm.xlu0 %530, %v497
      %v532 = vpop.permute.xlu0 %531
      %535 = vset.pattern.permute.xlu0 0
      %536 = vperm.xlu0 %535, %v498
      %v537 = vpop.permute.xlu0 %536
      %v540 = vperm.slane %v356, 0
      %v541 = vperm.slane %v356, 4
      %v544 = vperm.slane %v540, 0
      %v545 = vperm.slane %v541, 0
      %v546 = vmul.f32 %v502, %v544
      %v547 = vmul.f32 %v502, %v545
      %v548 = vmul.f32 %v507, %v544
      %v549 = vmul.f32 %v507, %v545
      %v550 = vmul.f32 %v512, %v544
      %v551 = vmul.f32 %v512, %v545
      %v552 = vmul.f32 %v517, %v544
      %v553 = vmul.f32 %v517, %v545
      %v554 = vmul.f32 %v522, %v544
      %v555 = vmul.f32 %v522, %v545
      %v556 = vmul.f32 %v527, %v544
      %v557 = vmul.f32 %v527, %v545
      %v558 = vmul.f32 %v532, %v544
      %v559 = vmul.f32 %v532, %v545
      %v560 = vmul.f32 %v537, %v544
      %v561 = vmul.f32 %v537, %v545
      %v562 = vadd.f32 %v475, %v546
      %v563 = vadd.f32 %v476, %v547
      %v564 = vadd.f32 %v477, %v548
      %v565 = vadd.f32 %v478, %v549
      %v566 = vadd.f32 %v479, %v550
      %v567 = vadd.f32 %v480, %v551
      %v568 = vadd.f32 %v481, %v552
      %v569 = vadd.f32 %v482, %v553
      %v570 = vadd.f32 %v483, %v554
      %v571 = vadd.f32 %v484, %v555
      %v572 = vadd.f32 %v485, %v556
      %v573 = vadd.f32 %v486, %v557
      %v574 = vadd.f32 %v487, %v558
      %v575 = vadd.f32 %v488, %v559
      %v576 = vadd.f32 %v489, %v560
      %v577 = vadd.f32 %v490, %v561
      %578 = vset.pattern.permute.xlu0 1
      %579 = vperm.xlu0 %578, %v491
      %v580 = vpop.permute.xlu0 %579
      %582 = vset.pattern.permute.xlu0 1
      %583 = vperm.xlu0 %582, %v492
      %v584 = vpop.permute.xlu0 %583
      %586 = vset.pattern.permute.xlu0 1
      %587 = vperm.xlu0 %586, %v493
      %v588 = vpop.permute.xlu0 %587
      %590 = vset.pattern.permute.xlu0 1
      %591 = vperm.xlu0 %590, %v494
      %v592 = vpop.permute.xlu0 %591
      %594 = vset.pattern.permute.xlu0 1
      %595 = vperm.xlu0 %594, %v495
      %v596 = vpop.permute.xlu0 %595
      %598 = vset.pattern.permute.xlu0 1
      %599 = vperm.xlu0 %598, %v496
      %v600 = vpop.permute.xlu0 %599
      %602 = vset.pattern.permute.xlu0 1
      %603 = vperm.xlu0 %602, %v497
      %v604 = vpop.permute.xlu0 %603
      %606 = vset.pattern.permute.xlu0 1
      %607 = vperm.xlu0 %606, %v498
      %v608 = vpop.permute.xlu0 %607
      %v610 = vperm.slane %v356, 1
      %v611 = vperm.slane %v356, 5
      %v614 = vperm.slane %v610, 1
      %v615 = vperm.slane %v611, 1
      %v616 = vmul.f32 %v580, %v614
      %v617 = vmul.f32 %v580, %v615
      %v618 = vmul.f32 %v584, %v614
      %v619 = vmul.f32 %v584, %v615
      %v620 = vmul.f32 %v588, %v614
      %v621 = vmul.f32 %v588, %v615
      %v622 = vmul.f32 %v592, %v614
      %v623 = vmul.f32 %v592, %v615
      %v624 = vmul.f32 %v596, %v614
      %v625 = vmul.f32 %v596, %v615
      %v626 = vmul.f32 %v600, %v614
      %v627 = vmul.f32 %v600, %v615
      %v628 = vmul.f32 %v604, %v614
      %v629 = vmul.f32 %v604, %v615
      %v630 = vmul.f32 %v608, %v614
      %v631 = vmul.f32 %v608, %v615
      %v632 = vadd.f32 %v562, %v616
      %v633 = vadd.f32 %v563, %v617
      %v634 = vadd.f32 %v564, %v618
      %v635 = vadd.f32 %v565, %v619
      %v636 = vadd.f32 %v566, %v620
      %v637 = vadd.f32 %v567, %v621
      %v638 = vadd.f32 %v568, %v622
      %v639 = vadd.f32 %v569, %v623
      %v640 = vadd.f32 %v570, %v624
      %v641 = vadd.f32 %v571, %v625
      %v642 = vadd.f32 %v572, %v626
      %v643 = vadd.f32 %v573, %v627
      %v644 = vadd.f32 %v574, %v628
      %v645 = vadd.f32 %v575, %v629
      %v646 = vadd.f32 %v576, %v630
      %v647 = vadd.f32 %v577, %v631
      %648 = vset.pattern.permute.xlu0 2
      %649 = vperm.xlu0 %648, %v491
      %v650 = vpop.permute.xlu0 %649
      %652 = vset.pattern.permute.xlu0 2
      %653 = vperm.xlu0 %652, %v492
      %v654 = vpop.permute.xlu0 %653
      %656 = vset.pattern.permute.xlu0 2
      %657 = vperm.xlu0 %656, %v493
      %v658 = vpop.permute.xlu0 %657
      %660 = vset.pattern.permute.xlu0 2
      %661 = vperm.xlu0 %660, %v494
      %v662 = vpop.permute.xlu0 %661
      %664 = vset.pattern.permute.xlu0 2
      %665 = vperm.xlu0 %664, %v495
      %v666 = vpop.permute.xlu0 %665
      %668 = vset.pattern.permute.xlu0 2
      %669 = vperm.xlu0 %668, %v496
      %v670 = vpop.permute.xlu0 %669
      %672 = vset.pattern.permute.xlu0 2
      %673 = vperm.xlu0 %672, %v497
      %v674 = vpop.permute.xlu0 %673
      %676 = vset.pattern.permute.xlu0 2
      %677 = vperm.xlu0 %676, %v498
      %v678 = vpop.permute.xlu0 %677
      %v680 = vperm.slane %v356, 2
      %v681 = vperm.slane %v356, 6
      %v684 = vperm.slane %v680, 2
      %v685 = vperm.slane %v681, 2
      %v686 = vmul.f32 %v650, %v684
      %v687 = vmul.f32 %v650, %v685
      %v688 = vmul.f32 %v654, %v684
      %v689 = vmul.f32 %v654, %v685
      %v690 = vmul.f32 %v658, %v684
      %v691 = vmul.f32 %v658, %v685
      %v692 = vmul.f32 %v662, %v684
      %v693 = vmul.f32 %v662, %v685
      %v694 = vmul.f32 %v666, %v684
      %v695 = vmul.f32 %v666, %v685
      %v696 = vmul.f32 %v670, %v684
      %v697 = vmul.f32 %v670, %v685
      %v698 = vmul.f32 %v674, %v684
      %v699 = vmul.f32 %v674, %v685
      %v700 = vmul.f32 %v678, %v684
      %v701 = vmul.f32 %v678, %v685
      %v702 = vadd.f32 %v632, %v686
      %v703 = vadd.f32 %v633, %v687
      %v704 = vadd.f32 %v634, %v688
      %v705 = vadd.f32 %v635, %v689
      %v706 = vadd.f32 %v636, %v690
      %v707 = vadd.f32 %v637, %v691
      %v708 = vadd.f32 %v638, %v692
      %v709 = vadd.f32 %v639, %v693
      %v710 = vadd.f32 %v640, %v694
      %v711 = vadd.f32 %v641, %v695
      %v712 = vadd.f32 %v642, %v696
      %v713 = vadd.f32 %v643, %v697
      %v714 = vadd.f32 %v644, %v698
      %v715 = vadd.f32 %v645, %v699
      %v716 = vadd.f32 %v646, %v700
      %v717 = vadd.f32 %v647, %v701
      %718 = vset.pattern.permute.xlu0 3
      %719 = vperm.xlu0 %718, %v491
      %v720 = vpop.permute.xlu0 %719
      %722 = vset.pattern.permute.xlu0 3
      %723 = vperm.xlu0 %722, %v492
      %v724 = vpop.permute.xlu0 %723
      %726 = vset.pattern.permute.xlu0 3
      %727 = vperm.xlu0 %726, %v493
      %v728 = vpop.permute.xlu0 %727
      %730 = vset.pattern.permute.xlu0 3
      %731 = vperm.xlu0 %730, %v494
      %v732 = vpop.permute.xlu0 %731
      %734 = vset.pattern.permute.xlu0 3
      %735 = vperm.xlu0 %734, %v495
      %v736 = vpop.permute.xlu0 %735
      %738 = vset.pattern.permute.xlu0 3
      %739 = vperm.xlu0 %738, %v496
      %v740 = vpop.permute.xlu0 %739
      %742 = vset.pattern.permute.xlu0 3
      %743 = vperm.xlu0 %742, %v497
      %v744 = vpop.permute.xlu0 %743
      %746 = vset.pattern.permute.xlu0 3
      %747 = vperm.xlu0 %746, %v498
      %v748 = vpop.permute.xlu0 %747
      %v750 = vperm.slane %v356, 3
      %v751 = vperm.slane %v356, 7
      %v754 = vperm.slane %v750, 3
      %v755 = vperm.slane %v751, 3
      %v756 = vmul.f32 %v720, %v754
      %v757 = vmul.f32 %v720, %v755
      %v758 = vmul.f32 %v724, %v754
      %v759 = vmul.f32 %v724, %v755
      %v760 = vmul.f32 %v728, %v754
      %v761 = vmul.f32 %v728, %v755
      %v762 = vmul.f32 %v732, %v754
      %v763 = vmul.f32 %v732, %v755
      %v764 = vmul.f32 %v736, %v754
      %v765 = vmul.f32 %v736, %v755
      %v766 = vmul.f32 %v740, %v754
      %v767 = vmul.f32 %v740, %v755
      %v768 = vmul.f32 %v744, %v754
      %v769 = vmul.f32 %v744, %v755
      %v770 = vmul.f32 %v748, %v754
      %v771 = vmul.f32 %v748, %v755
      %v772 = vadd.f32 %v702, %v756
      %v773 = vadd.f32 %v703, %v757
      %v774 = vadd.f32 %v704, %v758
      %v775 = vadd.f32 %v705, %v759
      %v776 = vadd.f32 %v706, %v760
      %v777 = vadd.f32 %v707, %v761
      %v778 = vadd.f32 %v708, %v762
      %v779 = vadd.f32 %v709, %v763
      %v780 = vadd.f32 %v710, %v764
      %v781 = vadd.f32 %v711, %v765
      %v782 = vadd.f32 %v712, %v766
      %v783 = vadd.f32 %v713, %v767
      %v784 = vadd.f32 %v714, %v768
      %v785 = vadd.f32 %v715, %v769
      %v786 = vadd.f32 %v716, %v770
      %v787 = vadd.f32 %v717, %v771
      %v788 = vmax.f32 %v772, 0.0
      %v789 = vmax.f32 %v773, 0.0
      %v790 = vmax.f32 %v774, 0.0
      %v791 = vmax.f32 %v775, 0.0
      %v792 = vmax.f32 %v776, 0.0
      %v793 = vmax.f32 %v777, 0.0
      %v794 = vmax.f32 %v778, 0.0
      %v795 = vmax.f32 %v779, 0.0
      %v796 = vmax.f32 %v780, 0.0
      %v797 = vmax.f32 %v781, 0.0
      %v798 = vmax.f32 %v782, 0.0
      %v799 = vmax.f32 %v783, 0.0
      %v800 = vmax.f32 %v784, 0.0
      %v801 = vmax.f32 %v785, 0.0
      %v802 = vmax.f32 %v786, 0.0
      %v803 = vmax.f32 %v787, 0.0
      %v804 = vld [vmem:[%s5] sm:$0xf]
      %v805 = vld [vmem:[%s5 + $0x4] sm:$0xf]
      %v806 = vld [vmem:[%s5 + $0x8] sm:$0xf]
      %v807 = vld [vmem:[%s5 + $0xc] sm:$0xf]
      %v808 = vld [vmem:[%s5 + $0x10] sm:$0xf]
      %v809 = vld [vmem:[%s5 + $0x14] sm:$0xf]
      %v810 = vld [vmem:[%s5 + $0x18] sm:$0xf]
      %v811 = vld [vmem:[%s5 + $0x1c] sm:$0xf]
      %v812 = vpack.c.bf16 %v790, %v788
      %v813 = vpack.c.bf16 %v791, %v789
      %v814 = vpack.c.bf16 %v794, %v792
      %v815 = vpack.c.bf16 %v795, %v793
      %v816 = vpack.c.bf16 %v798, %v796
      %v817 = vpack.c.bf16 %v799, %v797
      %v818 = vpack.c.bf16 %v802, %v800
      %v819 = vpack.c.bf16 %v803, %v801
      %v820 = vld [vmem:[%s6] sm:$0xff]
      %v821 = vld [vmem:[%s6 + $0x8] sm:$0xff]
      %v822 = vld [vmem:[%s6 + $0x10] sm:$0xff]
      %v823 = vld [vmem:[%s6 + $0x18] sm:$0xff]
      %v824 = vld [vmem:[%s6 + $0x20] sm:$0xff]
      %v825 = vld [vmem:[%s6 + $0x28] sm:$0xff]
      %v826 = vld [vmem:[%s6 + $0x30] sm:$0xff]
      %v827 = vld [vmem:[%s6 + $0x38] sm:$0xff]
      %829 = vset.pattern.permute.xlu0 0
      %830 = vperm.xlu0 %829, %v820
      %v831 = vpop.permute.xlu0 %830
      %834 = vset.pattern.permute.xlu0 0
      %835 = vperm.xlu0 %834, %v821
      %v836 = vpop.permute.xlu0 %835
      %839 = vset.pattern.permute.xlu0 0
      %840 = vperm.xlu0 %839, %v822
      %v841 = vpop.permute.xlu0 %840
      %844 = vset.pattern.permute.xlu0 0
      %845 = vperm.xlu0 %844, %v823
      %v846 = vpop.permute.xlu0 %845
      %849 = vset.pattern.permute.xlu0 0
      %850 = vperm.xlu0 %849, %v824
      %v851 = vpop.permute.xlu0 %850
      %854 = vset.pattern.permute.xlu0 0
      %855 = vperm.xlu0 %854, %v825
      %v856 = vpop.permute.xlu0 %855
      %859 = vset.pattern.permute.xlu0 0
      %860 = vperm.xlu0 %859, %v826
      %v861 = vpop.permute.xlu0 %860
      %864 = vset.pattern.permute.xlu0 0
      %865 = vperm.xlu0 %864, %v827
      %v866 = vpop.permute.xlu0 %865
      %v876 = vunpack.c.l.b16 %v804
      %v877 = vunpack.c.l.b16 %v805
      %v878 = vunpack.c.l.b16 %v806
      %v879 = vunpack.c.l.b16 %v807
      %v880 = vunpack.c.l.b16 %v808
      %v881 = vunpack.c.l.b16 %v809
      %v882 = vunpack.c.l.b16 %v810
      %v883 = vunpack.c.l.b16 %v811
      %v884 = vpack.c.b16 %v877, %v876
      %v885 = vpack.c.b16 %v879, %v878
      %v886 = vpack.c.b16 %v881, %v880
      %v887 = vpack.c.b16 %v883, %v882
      %vm888 = vcmask 523264
      %v890 = vsel %vm888, %v884, 0
      %v893 = vsel %vm888, %v885, 0
      %v896 = vsel %vm888, %v886, 0
      %v899 = vsel %vm888, %v887, 0
      %901 = vmatpush.bf16.msra.mxu0 0
      %902 = vmatpush.bf16.msra.mxu0 0
      %903 = vmatpush.bf16.msra.mxu0 0
      %904 = vmatpush.bf16.msra.mxu0 0
      %905 = vmatpush.bf16.msra.mxu0 %v818
      %906 = vmatpush.bf16.msra.mxu0 %v816
      %907 = vmatpush.bf16.msra.mxu0 %v814
      %908 = vmatpush.bf16.msra.mxu0 %v812
      %909 = vmatmul.bf16.gmra.mxu0 %v890
      %v910 = vpop.f32.mrf.mxu0
      %v911 = vadd.f32 %v831, %v910
      %v912 = vpop.f32.mrf.mxu0
      %v913 = vadd.f32 %v836, %v912
      %914 = vmatmul.bf16.gmra.mxu0 %v893
      %v915 = vpop.f32.mrf.mxu0
      %v916 = vadd.f32 %v841, %v915
      %v917 = vpop.f32.mrf.mxu0
      %v918 = vadd.f32 %v846, %v917
      %919 = vmatmul.bf16.gmra.mxu0 %v896
      %v920 = vpop.f32.mrf.mxu0
      %v921 = vadd.f32 %v851, %v920
      %v922 = vpop.f32.mrf.mxu0
      %v923 = vadd.f32 %v856, %v922
      %924 = vmatmul.bf16.gmra.mxu0 %v899
      %v925 = vpop.f32.mrf.mxu0
      %v926 = vadd.f32 %v861, %v925
      %v927 = vpop.f32.mrf.mxu0
      %v928 = vadd.f32 %v866, %v927
      %929 = vdwg.mxu0
      %930 = vmatpush.bf16.msra.mxu0 0
      %931 = vmatpush.bf16.msra.mxu0 0
      %932 = vmatpush.bf16.msra.mxu0 0
      %933 = vmatpush.bf16.msra.mxu0 0
      %934 = vmatpush.bf16.msra.mxu0 %v819
      %935 = vmatpush.bf16.msra.mxu0 %v817
      %936 = vmatpush.bf16.msra.mxu0 %v815
      %937 = vmatpush.bf16.msra.mxu0 %v813
      %938 = vmatmul.bf16.gmra.mxu0 %v890
      %v939 = vpop.f32.mrf.mxu0
      %v940 = vadd.f32 %v831, %v939
      %v941 = vpop.f32.mrf.mxu0
      %v942 = vadd.f32 %v836, %v941
      %943 = vmatmul.bf16.gmra.mxu0 %v893
      %v944 = vpop.f32.mrf.mxu0
      %v945 = vadd.f32 %v841, %v944
      %v946 = vpop.f32.mrf.mxu0
      %v947 = vadd.f32 %v846, %v946
      %948 = vmatmul.bf16.gmra.mxu0 %v896
      %v949 = vpop.f32.mrf.mxu0
      %v950 = vadd.f32 %v851, %v949
      %v951 = vpop.f32.mrf.mxu0
      %v952 = vadd.f32 %v856, %v951
      %953 = vmatmul.bf16.gmra.mxu0 %v899
      %v954 = vpop.f32.mrf.mxu0
      %v955 = vadd.f32 %v861, %v954
      %v956 = vpop.f32.mrf.mxu0
      %v957 = vadd.f32 %v866, %v956
      %958 = vdwg.mxu0
      %v959 = vmax.f32 %v911, 0.0
      %v960 = vmax.f32 %v940, 0.0
      %v961 = vmax.f32 %v913, 0.0
      %v962 = vmax.f32 %v942, 0.0
      %v963 = vmax.f32 %v916, 0.0
      %v964 = vmax.f32 %v945, 0.0
      %v965 = vmax.f32 %v918, 0.0
      %v966 = vmax.f32 %v947, 0.0
      %v967 = vmax.f32 %v921, 0.0
      %v968 = vmax.f32 %v950, 0.0
      %v969 = vmax.f32 %v923, 0.0
      %v970 = vmax.f32 %v952, 0.0
      %v971 = vmax.f32 %v926, 0.0
      %v972 = vmax.f32 %v955, 0.0
      %v973 = vmax.f32 %v928, 0.0
      %v974 = vmax.f32 %v957, 0.0
      %v975 = vld [vmem:[%s8] sm:$0xf]
      %v976 = vld [vmem:[%s7] sm:$0xf]
      %978 = vset.pattern.permute.xlu0 0
      %979 = vperm.xlu0 %978, %v976
      %v980 = vpop.permute.xlu0 %979
      %v982 = vperm.slane %v959, 0
      %v983 = vperm.slane %v960, 0
      %v984 = vmul.f32 %v980, %v982
      %v985 = vmul.f32 %v980, %v983
      %987 = vset.pattern.permute.xlu0 0
      %988 = vperm.xlu0 %987, %v975
      %v989 = vpop.permute.xlu0 %988
      %v991 = vadd.f32 %v989, %v984
      %v992 = vadd.f32 %v989, %v985
      %993 = vset.pattern.permute.xlu0 1
      %994 = vperm.xlu0 %993, %v976
      %v995 = vpop.permute.xlu0 %994
      %v997 = vperm.slane %v959, 1
      %v998 = vperm.slane %v960, 1
      %v999 = vmul.f32 %v995, %v997
      %v1000 = vmul.f32 %v995, %v998
      %v1001 = vadd.f32 %v991, %v999
      %v1002 = vadd.f32 %v992, %v1000
      %1003 = vset.pattern.permute.xlu0 2
      %1004 = vperm.xlu0 %1003, %v976
      %v1005 = vpop.permute.xlu0 %1004
      %v1007 = vperm.slane %v959, 2
      %v1008 = vperm.slane %v960, 2
      %v1009 = vmul.f32 %v1005, %v1007
      %v1010 = vmul.f32 %v1005, %v1008
      %v1011 = vadd.f32 %v1001, %v1009
      %v1012 = vadd.f32 %v1002, %v1010
      %1013 = vset.pattern.permute.xlu0 3
      %1014 = vperm.xlu0 %1013, %v976
      %v1015 = vpop.permute.xlu0 %1014
      %v1017 = vperm.slane %v959, 3
      %v1018 = vperm.slane %v960, 3
      %v1019 = vmul.f32 %v1015, %v1017
      %v1020 = vmul.f32 %v1015, %v1018
      %v1021 = vadd.f32 %v1011, %v1019
      %v1022 = vadd.f32 %v1012, %v1020
      %1023 = vset.pattern.permute.xlu0 4
      %1024 = vperm.xlu0 %1023, %v976
      %v1025 = vpop.permute.xlu0 %1024
      %v1027 = vperm.slane %v959, 4
      %v1028 = vperm.slane %v960, 4
      %v1029 = vmul.f32 %v1025, %v1027
      %v1030 = vmul.f32 %v1025, %v1028
      %v1031 = vadd.f32 %v1021, %v1029
      %v1032 = vadd.f32 %v1022, %v1030
      %1033 = vset.pattern.permute.xlu0 5
      %1034 = vperm.xlu0 %1033, %v976
      %v1035 = vpop.permute.xlu0 %1034
      %v1037 = vperm.slane %v959, 5
      %v1038 = vperm.slane %v960, 5
      %v1039 = vmul.f32 %v1035, %v1037
      %v1040 = vmul.f32 %v1035, %v1038
      %v1041 = vadd.f32 %v1031, %v1039
      %v1042 = vadd.f32 %v1032, %v1040
      %1043 = vset.pattern.permute.xlu0 6
      %1044 = vperm.xlu0 %1043, %v976
      %v1045 = vpop.permute.xlu0 %1044
      %v1047 = vperm.slane %v959, 6
      %v1048 = vperm.slane %v960, 6
      %v1049 = vmul.f32 %v1045, %v1047
      %v1050 = vmul.f32 %v1045, %v1048
      %v1051 = vadd.f32 %v1041, %v1049
      %v1052 = vadd.f32 %v1042, %v1050
      %1053 = vset.pattern.permute.xlu0 7
      %1054 = vperm.xlu0 %1053, %v976
      %v1055 = vpop.permute.xlu0 %1054
      %v1057 = vperm.slane %v959, 7
      %v1058 = vperm.slane %v960, 7
      %v1059 = vmul.f32 %v1055, %v1057
      %v1060 = vmul.f32 %v1055, %v1058
      %v1061 = vadd.f32 %v1051, %v1059
      %v1062 = vadd.f32 %v1052, %v1060
      %1063 = vset.pattern.permute.xlu0 8
      %1064 = vperm.xlu0 %1063, %v976
      %v1065 = vpop.permute.xlu0 %1064
      %v1067 = vperm.slane %v961, 0
      %v1068 = vperm.slane %v962, 0
      %v1069 = vmul.f32 %v1065, %v1067
      %v1070 = vmul.f32 %v1065, %v1068
      %v1071 = vadd.f32 %v1061, %v1069
      %v1072 = vadd.f32 %v1062, %v1070
      %1073 = vset.pattern.permute.xlu0 9
      %1074 = vperm.xlu0 %1073, %v976
      %v1075 = vpop.permute.xlu0 %1074
      %v1077 = vperm.slane %v961, 1
      %v1078 = vperm.slane %v962, 1
      %v1079 = vmul.f32 %v1075, %v1077
      %v1080 = vmul.f32 %v1075, %v1078
      %v1081 = vadd.f32 %v1071, %v1079
      %v1082 = vadd.f32 %v1072, %v1080
      %1083 = vset.pattern.permute.xlu0 10
      %1084 = vperm.xlu0 %1083, %v976
      %v1085 = vpop.permute.xlu0 %1084
      %v1087 = vperm.slane %v961, 2
      %v1088 = vperm.slane %v962, 2
      %v1089 = vmul.f32 %v1085, %v1087
      %v1090 = vmul.f32 %v1085, %v1088
      %v1091 = vadd.f32 %v1081, %v1089
      %v1092 = vadd.f32 %v1082, %v1090
      %1093 = vset.pattern.permute.xlu0 11
      %1094 = vperm.xlu0 %1093, %v976
      %v1095 = vpop.permute.xlu0 %1094
      %v1097 = vperm.slane %v961, 3
      %v1098 = vperm.slane %v962, 3
      %v1099 = vmul.f32 %v1095, %v1097
      %v1100 = vmul.f32 %v1095, %v1098
      %v1101 = vadd.f32 %v1091, %v1099
      %v1102 = vadd.f32 %v1092, %v1100
      %1103 = vset.pattern.permute.xlu0 12
      %1104 = vperm.xlu0 %1103, %v976
      %v1105 = vpop.permute.xlu0 %1104
      %v1107 = vperm.slane %v961, 4
      %v1108 = vperm.slane %v962, 4
      %v1109 = vmul.f32 %v1105, %v1107
      %v1110 = vmul.f32 %v1105, %v1108
      %v1111 = vadd.f32 %v1101, %v1109
      %v1112 = vadd.f32 %v1102, %v1110
      %1113 = vset.pattern.permute.xlu0 13
      %1114 = vperm.xlu0 %1113, %v976
      %v1115 = vpop.permute.xlu0 %1114
      %v1117 = vperm.slane %v961, 5
      %v1118 = vperm.slane %v962, 5
      %v1119 = vmul.f32 %v1115, %v1117
      %v1120 = vmul.f32 %v1115, %v1118
      %v1121 = vadd.f32 %v1111, %v1119
      %v1122 = vadd.f32 %v1112, %v1120
      %1123 = vset.pattern.permute.xlu0 14
      %1124 = vperm.xlu0 %1123, %v976
      %v1125 = vpop.permute.xlu0 %1124
      %v1127 = vperm.slane %v961, 6
      %v1128 = vperm.slane %v962, 6
      %v1129 = vmul.f32 %v1125, %v1127
      %v1130 = vmul.f32 %v1125, %v1128
      %v1131 = vadd.f32 %v1121, %v1129
      %v1132 = vadd.f32 %v1122, %v1130
      %1133 = vset.pattern.permute.xlu0 15
      %1134 = vperm.xlu0 %1133, %v976
      %v1135 = vpop.permute.xlu0 %1134
      %v1137 = vperm.slane %v961, 7
      %v1138 = vperm.slane %v962, 7
      %v1139 = vmul.f32 %v1135, %v1137
      %v1140 = vmul.f32 %v1135, %v1138
      %v1141 = vadd.f32 %v1131, %v1139
      %v1142 = vadd.f32 %v1132, %v1140
      %1143 = vset.pattern.permute.xlu0 16
      %1144 = vperm.xlu0 %1143, %v976
      %v1145 = vpop.permute.xlu0 %1144
      %v1147 = vperm.slane %v963, 0
      %v1148 = vperm.slane %v964, 0
      %v1149 = vmul.f32 %v1145, %v1147
      %v1150 = vmul.f32 %v1145, %v1148
      %v1151 = vadd.f32 %v1141, %v1149
      %v1152 = vadd.f32 %v1142, %v1150
      %1153 = vset.pattern.permute.xlu0 17
      %1154 = vperm.xlu0 %1153, %v976
      %v1155 = vpop.permute.xlu0 %1154
      %v1157 = vperm.slane %v963, 1
      %v1158 = vperm.slane %v964, 1
      %v1159 = vmul.f32 %v1155, %v1157
      %v1160 = vmul.f32 %v1155, %v1158
      %v1161 = vadd.f32 %v1151, %v1159
      %v1162 = vadd.f32 %v1152, %v1160
      %1163 = vset.pattern.permute.xlu0 18
      %1164 = vperm.xlu0 %1163, %v976
      %v1165 = vpop.permute.xlu0 %1164
      %v1167 = vperm.slane %v963, 2
      %v1168 = vperm.slane %v964, 2
      %v1169 = vmul.f32 %v1165, %v1167
      %v1170 = vmul.f32 %v1165, %v1168
      %v1171 = vadd.f32 %v1161, %v1169
      %v1172 = vadd.f32 %v1162, %v1170
      %1173 = vset.pattern.permute.xlu0 19
      %1174 = vperm.xlu0 %1173, %v976
      %v1175 = vpop.permute.xlu0 %1174
      %v1177 = vperm.slane %v963, 3
      %v1178 = vperm.slane %v964, 3
      %v1179 = vmul.f32 %v1175, %v1177
      %v1180 = vmul.f32 %v1175, %v1178
      %v1181 = vadd.f32 %v1171, %v1179
      %v1182 = vadd.f32 %v1172, %v1180
      %1183 = vset.pattern.permute.xlu0 20
      %1184 = vperm.xlu0 %1183, %v976
      %v1185 = vpop.permute.xlu0 %1184
      %v1187 = vperm.slane %v963, 4
      %v1188 = vperm.slane %v964, 4
      %v1189 = vmul.f32 %v1185, %v1187
      %v1190 = vmul.f32 %v1185, %v1188
      %v1191 = vadd.f32 %v1181, %v1189
      %v1192 = vadd.f32 %v1182, %v1190
      %1193 = vset.pattern.permute.xlu0 21
      %1194 = vperm.xlu0 %1193, %v976
      %v1195 = vpop.permute.xlu0 %1194
      %v1197 = vperm.slane %v963, 5
      %v1198 = vperm.slane %v964, 5
      %v1199 = vmul.f32 %v1195, %v1197
      %v1200 = vmul.f32 %v1195, %v1198
      %v1201 = vadd.f32 %v1191, %v1199
      %v1202 = vadd.f32 %v1192, %v1200
      %1203 = vset.pattern.permute.xlu0 22
      %1204 = vperm.xlu0 %1203, %v976
      %v1205 = vpop.permute.xlu0 %1204
      %v1207 = vperm.slane %v963, 6
      %v1208 = vperm.slane %v964, 6
      %v1209 = vmul.f32 %v1205, %v1207
      %v1210 = vmul.f32 %v1205, %v1208
      %v1211 = vadd.f32 %v1201, %v1209
      %v1212 = vadd.f32 %v1202, %v1210
      %1213 = vset.pattern.permute.xlu0 23
      %1214 = vperm.xlu0 %1213, %v976
      %v1215 = vpop.permute.xlu0 %1214
      %v1217 = vperm.slane %v963, 7
      %v1218 = vperm.slane %v964, 7
      %v1219 = vmul.f32 %v1215, %v1217
      %v1220 = vmul.f32 %v1215, %v1218
      %v1221 = vadd.f32 %v1211, %v1219
      %v1222 = vadd.f32 %v1212, %v1220
      %1223 = vset.pattern.permute.xlu0 24
      %1224 = vperm.xlu0 %1223, %v976
      %v1225 = vpop.permute.xlu0 %1224
      %v1227 = vperm.slane %v965, 0
      %v1228 = vperm.slane %v966, 0
      %v1229 = vmul.f32 %v1225, %v1227
      %v1230 = vmul.f32 %v1225, %v1228
      %v1231 = vadd.f32 %v1221, %v1229
      %v1232 = vadd.f32 %v1222, %v1230
      %1233 = vset.pattern.permute.xlu0 25
      %1234 = vperm.xlu0 %1233, %v976
      %v1235 = vpop.permute.xlu0 %1234
      %v1237 = vperm.slane %v965, 1
      %v1238 = vperm.slane %v966, 1
      %v1239 = vmul.f32 %v1235, %v1237
      %v1240 = vmul.f32 %v1235, %v1238
      %v1241 = vadd.f32 %v1231, %v1239
      %v1242 = vadd.f32 %v1232, %v1240
      %1243 = vset.pattern.permute.xlu0 26
      %1244 = vperm.xlu0 %1243, %v976
      %v1245 = vpop.permute.xlu0 %1244
      %v1247 = vperm.slane %v965, 2
      %v1248 = vperm.slane %v966, 2
      %v1249 = vmul.f32 %v1245, %v1247
      %v1250 = vmul.f32 %v1245, %v1248
      %v1251 = vadd.f32 %v1241, %v1249
      %v1252 = vadd.f32 %v1242, %v1250
      %1253 = vset.pattern.permute.xlu0 27
      %1254 = vperm.xlu0 %1253, %v976
      %v1255 = vpop.permute.xlu0 %1254
      %v1257 = vperm.slane %v965, 3
      %v1258 = vperm.slane %v966, 3
      %v1259 = vmul.f32 %v1255, %v1257
      %v1260 = vmul.f32 %v1255, %v1258
      %v1261 = vadd.f32 %v1251, %v1259
      %v1262 = vadd.f32 %v1252, %v1260
      %1263 = vset.pattern.permute.xlu0 28
      %1264 = vperm.xlu0 %1263, %v976
      %v1265 = vpop.permute.xlu0 %1264
      %v1267 = vperm.slane %v965, 4
      %v1268 = vperm.slane %v966, 4
      %v1269 = vmul.f32 %v1265, %v1267
      %v1270 = vmul.f32 %v1265, %v1268
      %v1271 = vadd.f32 %v1261, %v1269
      %v1272 = vadd.f32 %v1262, %v1270
      %1273 = vset.pattern.permute.xlu0 29
      %1274 = vperm.xlu0 %1273, %v976
      %v1275 = vpop.permute.xlu0 %1274
      %v1277 = vperm.slane %v965, 5
      %v1278 = vperm.slane %v966, 5
      %v1279 = vmul.f32 %v1275, %v1277
      %v1280 = vmul.f32 %v1275, %v1278
      %v1281 = vadd.f32 %v1271, %v1279
      %v1282 = vadd.f32 %v1272, %v1280
      %1283 = vset.pattern.permute.xlu0 30
      %1284 = vperm.xlu0 %1283, %v976
      %v1285 = vpop.permute.xlu0 %1284
      %v1287 = vperm.slane %v965, 6
      %v1288 = vperm.slane %v966, 6
      %v1289 = vmul.f32 %v1285, %v1287
      %v1290 = vmul.f32 %v1285, %v1288
      %v1291 = vadd.f32 %v1281, %v1289
      %v1292 = vadd.f32 %v1282, %v1290
      %1293 = vset.pattern.permute.xlu0 31
      %1294 = vperm.xlu0 %1293, %v976
      %v1295 = vpop.permute.xlu0 %1294
      %v1297 = vperm.slane %v965, 7
      %v1298 = vperm.slane %v966, 7
      %v1299 = vmul.f32 %v1295, %v1297
      %v1300 = vmul.f32 %v1295, %v1298
      %v1301 = vadd.f32 %v1291, %v1299
      %v1302 = vadd.f32 %v1292, %v1300
      %1303 = vset.pattern.permute.xlu0 32
      %1304 = vperm.xlu0 %1303, %v976
      %v1305 = vpop.permute.xlu0 %1304
      %v1307 = vperm.slane %v967, 0
      %v1308 = vperm.slane %v968, 0
      %v1309 = vmul.f32 %v1305, %v1307
      %v1310 = vmul.f32 %v1305, %v1308
      %v1311 = vadd.f32 %v1301, %v1309
      %v1312 = vadd.f32 %v1302, %v1310
      %1313 = vset.pattern.permute.xlu0 33
      %1314 = vperm.xlu0 %1313, %v976
      %v1315 = vpop.permute.xlu0 %1314
      %v1317 = vperm.slane %v967, 1
      %v1318 = vperm.slane %v968, 1
      %v1319 = vmul.f32 %v1315, %v1317
      %v1320 = vmul.f32 %v1315, %v1318
      %v1321 = vadd.f32 %v1311, %v1319
      %v1322 = vadd.f32 %v1312, %v1320
      %1323 = vset.pattern.permute.xlu0 34
      %1324 = vperm.xlu0 %1323, %v976
      %v1325 = vpop.permute.xlu0 %1324
      %v1327 = vperm.slane %v967, 2
      %v1328 = vperm.slane %v968, 2
      %v1329 = vmul.f32 %v1325, %v1327
      %v1330 = vmul.f32 %v1325, %v1328
      %v1331 = vadd.f32 %v1321, %v1329
      %v1332 = vadd.f32 %v1322, %v1330
      %1333 = vset.pattern.permute.xlu0 35
      %1334 = vperm.xlu0 %1333, %v976
      %v1335 = vpop.permute.xlu0 %1334
      %v1337 = vperm.slane %v967, 3
      %v1338 = vperm.slane %v968, 3
      %v1339 = vmul.f32 %v1335, %v1337
      %v1340 = vmul.f32 %v1335, %v1338
      %v1341 = vadd.f32 %v1331, %v1339
      %v1342 = vadd.f32 %v1332, %v1340
      %1343 = vset.pattern.permute.xlu0 36
      %1344 = vperm.xlu0 %1343, %v976
      %v1345 = vpop.permute.xlu0 %1344
      %v1347 = vperm.slane %v967, 4
      %v1348 = vperm.slane %v968, 4
      %v1349 = vmul.f32 %v1345, %v1347
      %v1350 = vmul.f32 %v1345, %v1348
      %v1351 = vadd.f32 %v1341, %v1349
      %v1352 = vadd.f32 %v1342, %v1350
      %1353 = vset.pattern.permute.xlu0 37
      %1354 = vperm.xlu0 %1353, %v976
      %v1355 = vpop.permute.xlu0 %1354
      %v1357 = vperm.slane %v967, 5
      %v1358 = vperm.slane %v968, 5
      %v1359 = vmul.f32 %v1355, %v1357
      %v1360 = vmul.f32 %v1355, %v1358
      %v1361 = vadd.f32 %v1351, %v1359
      %v1362 = vadd.f32 %v1352, %v1360
      %1363 = vset.pattern.permute.xlu0 38
      %1364 = vperm.xlu0 %1363, %v976
      %v1365 = vpop.permute.xlu0 %1364
      %v1367 = vperm.slane %v967, 6
      %v1368 = vperm.slane %v968, 6
      %v1369 = vmul.f32 %v1365, %v1367
      %v1370 = vmul.f32 %v1365, %v1368
      %v1371 = vadd.f32 %v1361, %v1369
      %v1372 = vadd.f32 %v1362, %v1370
      %1373 = vset.pattern.permute.xlu0 39
      %1374 = vperm.xlu0 %1373, %v976
      %v1375 = vpop.permute.xlu0 %1374
      %v1377 = vperm.slane %v967, 7
      %v1378 = vperm.slane %v968, 7
      %v1379 = vmul.f32 %v1375, %v1377
      %v1380 = vmul.f32 %v1375, %v1378
      %v1381 = vadd.f32 %v1371, %v1379
      %v1382 = vadd.f32 %v1372, %v1380
      %1383 = vset.pattern.permute.xlu0 40
      %1384 = vperm.xlu0 %1383, %v976
      %v1385 = vpop.permute.xlu0 %1384
      %v1387 = vperm.slane %v969, 0
      %v1388 = vperm.slane %v970, 0
      %v1389 = vmul.f32 %v1385, %v1387
      %v1390 = vmul.f32 %v1385, %v1388
      %v1391 = vadd.f32 %v1381, %v1389
      %v1392 = vadd.f32 %v1382, %v1390
      %1393 = vset.pattern.permute.xlu0 41
      %1394 = vperm.xlu0 %1393, %v976
      %v1395 = vpop.permute.xlu0 %1394
      %v1397 = vperm.slane %v969, 1
      %v1398 = vperm.slane %v970, 1
      %v1399 = vmul.f32 %v1395, %v1397
      %v1400 = vmul.f32 %v1395, %v1398
      %v1401 = vadd.f32 %v1391, %v1399
      %v1402 = vadd.f32 %v1392, %v1400
      %1403 = vset.pattern.permute.xlu0 42
      %1404 = vperm.xlu0 %1403, %v976
      %v1405 = vpop.permute.xlu0 %1404
      %v1407 = vperm.slane %v969, 2
      %v1408 = vperm.slane %v970, 2
      %v1409 = vmul.f32 %v1405, %v1407
      %v1410 = vmul.f32 %v1405, %v1408
      %v1411 = vadd.f32 %v1401, %v1409
      %v1412 = vadd.f32 %v1402, %v1410
      %1413 = vset.pattern.permute.xlu0 43
      %1414 = vperm.xlu0 %1413, %v976
      %v1415 = vpop.permute.xlu0 %1414
      %v1417 = vperm.slane %v969, 3
      %v1418 = vperm.slane %v970, 3
      %v1419 = vmul.f32 %v1415, %v1417
      %v1420 = vmul.f32 %v1415, %v1418
      %v1421 = vadd.f32 %v1411, %v1419
      %v1422 = vadd.f32 %v1412, %v1420
      %1423 = vset.pattern.permute.xlu0 44
      %1424 = vperm.xlu0 %1423, %v976
      %v1425 = vpop.permute.xlu0 %1424
      %v1427 = vperm.slane %v969, 4
      %v1428 = vperm.slane %v970, 4
      %v1429 = vmul.f32 %v1425, %v1427
      %v1430 = vmul.f32 %v1425, %v1428
      %v1431 = vadd.f32 %v1421, %v1429
      %v1432 = vadd.f32 %v1422, %v1430
      %1433 = vset.pattern.permute.xlu0 45
      %1434 = vperm.xlu0 %1433, %v976
      %v1435 = vpop.permute.xlu0 %1434
      %v1437 = vperm.slane %v969, 5
      %v1438 = vperm.slane %v970, 5
      %v1439 = vmul.f32 %v1435, %v1437
      %v1440 = vmul.f32 %v1435, %v1438
      %v1441 = vadd.f32 %v1431, %v1439
      %v1442 = vadd.f32 %v1432, %v1440
      %1443 = vset.pattern.permute.xlu0 46
      %1444 = vperm.xlu0 %1443, %v976
      %v1445 = vpop.permute.xlu0 %1444
      %v1447 = vperm.slane %v969, 6
      %v1448 = vperm.slane %v970, 6
      %v1449 = vmul.f32 %v1445, %v1447
      %v1450 = vmul.f32 %v1445, %v1448
      %v1451 = vadd.f32 %v1441, %v1449
      %v1452 = vadd.f32 %v1442, %v1450
      %1453 = vset.pattern.permute.xlu0 47
      %1454 = vperm.xlu0 %1453, %v976
      %v1455 = vpop.permute.xlu0 %1454
      %v1457 = vperm.slane %v969, 7
      %v1458 = vperm.slane %v970, 7
      %v1459 = vmul.f32 %v1455, %v1457
      %v1460 = vmul.f32 %v1455, %v1458
      %v1461 = vadd.f32 %v1451, %v1459
      %v1462 = vadd.f32 %v1452, %v1460
      %1463 = vset.pattern.permute.xlu0 48
      %1464 = vperm.xlu0 %1463, %v976
      %v1465 = vpop.permute.xlu0 %1464
      %v1467 = vperm.slane %v971, 0
      %v1468 = vperm.slane %v972, 0
      %v1469 = vmul.f32 %v1465, %v1467
      %v1470 = vmul.f32 %v1465, %v1468
      %v1471 = vadd.f32 %v1461, %v1469
      %v1472 = vadd.f32 %v1462, %v1470
      %1473 = vset.pattern.permute.xlu0 49
      %1474 = vperm.xlu0 %1473, %v976
      %v1475 = vpop.permute.xlu0 %1474
      %v1477 = vperm.slane %v971, 1
      %v1478 = vperm.slane %v972, 1
      %v1479 = vmul.f32 %v1475, %v1477
      %v1480 = vmul.f32 %v1475, %v1478
      %v1481 = vadd.f32 %v1471, %v1479
      %v1482 = vadd.f32 %v1472, %v1480
      %1483 = vset.pattern.permute.xlu0 50
      %1484 = vperm.xlu0 %1483, %v976
      %v1485 = vpop.permute.xlu0 %1484
      %v1487 = vperm.slane %v971, 2
      %v1488 = vperm.slane %v972, 2
      %v1489 = vmul.f32 %v1485, %v1487
      %v1490 = vmul.f32 %v1485, %v1488
      %v1491 = vadd.f32 %v1481, %v1489
      %v1492 = vadd.f32 %v1482, %v1490
      %1493 = vset.pattern.permute.xlu0 51
      %1494 = vperm.xlu0 %1493, %v976
      %v1495 = vpop.permute.xlu0 %1494
      %v1497 = vperm.slane %v971, 3
      %v1498 = vperm.slane %v972, 3
      %v1499 = vmul.f32 %v1495, %v1497
      %v1500 = vmul.f32 %v1495, %v1498
      %v1501 = vadd.f32 %v1491, %v1499
      %v1502 = vadd.f32 %v1492, %v1500
      %1503 = vset.pattern.permute.xlu0 52
      %1504 = vperm.xlu0 %1503, %v976
      %v1505 = vpop.permute.xlu0 %1504
      %v1507 = vperm.slane %v971, 4
      %v1508 = vperm.slane %v972, 4
      %v1509 = vmul.f32 %v1505, %v1507
      %v1510 = vmul.f32 %v1505, %v1508
      %v1511 = vadd.f32 %v1501, %v1509
      %v1512 = vadd.f32 %v1502, %v1510
      %1513 = vset.pattern.permute.xlu0 53
      %1514 = vperm.xlu0 %1513, %v976
      %v1515 = vpop.permute.xlu0 %1514
      %v1517 = vperm.slane %v971, 5
      %v1518 = vperm.slane %v972, 5
      %v1519 = vmul.f32 %v1515, %v1517
      %v1520 = vmul.f32 %v1515, %v1518
      %v1521 = vadd.f32 %v1511, %v1519
      %v1522 = vadd.f32 %v1512, %v1520
      %1523 = vset.pattern.permute.xlu0 54
      %1524 = vperm.xlu0 %1523, %v976
      %v1525 = vpop.permute.xlu0 %1524
      %v1527 = vperm.slane %v971, 6
      %v1528 = vperm.slane %v972, 6
      %v1529 = vmul.f32 %v1525, %v1527
      %v1530 = vmul.f32 %v1525, %v1528
      %v1531 = vadd.f32 %v1521, %v1529
      %v1532 = vadd.f32 %v1522, %v1530
      %1533 = vset.pattern.permute.xlu0 55
      %1534 = vperm.xlu0 %1533, %v976
      %v1535 = vpop.permute.xlu0 %1534
      %v1537 = vperm.slane %v971, 7
      %v1538 = vperm.slane %v972, 7
      %v1539 = vmul.f32 %v1535, %v1537
      %v1540 = vmul.f32 %v1535, %v1538
      %v1541 = vadd.f32 %v1531, %v1539
      %v1542 = vadd.f32 %v1532, %v1540
      %1543 = vset.pattern.permute.xlu0 56
      %1544 = vperm.xlu0 %1543, %v976
      %v1545 = vpop.permute.xlu0 %1544
      %v1547 = vperm.slane %v973, 0
      %v1548 = vperm.slane %v974, 0
      %v1549 = vmul.f32 %v1545, %v1547
      %v1550 = vmul.f32 %v1545, %v1548
      %v1551 = vadd.f32 %v1541, %v1549
      %v1552 = vadd.f32 %v1542, %v1550
      %1553 = vset.pattern.permute.xlu0 57
      %1554 = vperm.xlu0 %1553, %v976
      %v1555 = vpop.permute.xlu0 %1554
      %v1557 = vperm.slane %v973, 1
      %v1558 = vperm.slane %v974, 1
      %v1559 = vmul.f32 %v1555, %v1557
      %v1560 = vmul.f32 %v1555, %v1558
      %v1561 = vadd.f32 %v1551, %v1559
      %v1562 = vadd.f32 %v1552, %v1560
      %1563 = vset.pattern.permute.xlu0 58
      %1564 = vperm.xlu0 %1563, %v976
      %v1565 = vpop.permute.xlu0 %1564
      %v1567 = vperm.slane %v973, 2
      %v1568 = vperm.slane %v974, 2
      %v1569 = vmul.f32 %v1565, %v1567
      %v1570 = vmul.f32 %v1565, %v1568
      %v1571 = vadd.f32 %v1561, %v1569
      %v1572 = vadd.f32 %v1562, %v1570
      %1573 = vset.pattern.permute.xlu0 59
      %1574 = vperm.xlu0 %1573, %v976
      %v1575 = vpop.permute.xlu0 %1574
      %v1577 = vperm.slane %v973, 3
      %v1578 = vperm.slane %v974, 3
      %v1579 = vmul.f32 %v1575, %v1577
      %v1580 = vmul.f32 %v1575, %v1578
      %v1581 = vadd.f32 %v1571, %v1579
      %v1582 = vadd.f32 %v1572, %v1580
      %1583 = vset.pattern.permute.xlu0 60
      %1584 = vperm.xlu0 %1583, %v976
      %v1585 = vpop.permute.xlu0 %1584
      %v1587 = vperm.slane %v973, 4
      %v1588 = vperm.slane %v974, 4
      %v1589 = vmul.f32 %v1585, %v1587
      %v1590 = vmul.f32 %v1585, %v1588
      %v1591 = vadd.f32 %v1581, %v1589
      %v1592 = vadd.f32 %v1582, %v1590
      %1593 = vset.pattern.permute.xlu0 61
      %1594 = vperm.xlu0 %1593, %v976
      %v1595 = vpop.permute.xlu0 %1594
      %v1597 = vperm.slane %v973, 5
      %v1598 = vperm.slane %v974, 5
      %v1599 = vmul.f32 %v1595, %v1597
      %v1600 = vmul.f32 %v1595, %v1598
      %v1601 = vadd.f32 %v1591, %v1599
      %v1602 = vadd.f32 %v1592, %v1600
      %1603 = vset.pattern.permute.xlu0 62
      %1604 = vperm.xlu0 %1603, %v976
      %v1605 = vpop.permute.xlu0 %1604
      %v1607 = vperm.slane %v973, 6
      %v1608 = vperm.slane %v974, 6
      %v1609 = vmul.f32 %v1605, %v1607
      %v1610 = vmul.f32 %v1605, %v1608
      %v1611 = vadd.f32 %v1601, %v1609
      %v1612 = vadd.f32 %v1602, %v1610
      %1613 = vset.pattern.permute.xlu0 63
      %1614 = vperm.xlu0 %1613, %v976
      %v1615 = vpop.permute.xlu0 %1614
      %v1617 = vperm.slane %v973, 7
      %v1618 = vperm.slane %v974, 7
      %v1619 = vmul.f32 %v1615, %v1617
      %v1620 = vmul.f32 %v1615, %v1618
      %v1621 = vadd.f32 %v1611, %v1619
      %v1622 = vadd.f32 %v1612, %v1620
      %v1625 = vrot.slane %v1622, 4
      %vm1626 = vcmask 1043456
      %v1627 = vsel %vm1626, %v1621, %v1625
      %1629 = vst [vmem:[%s353] sm:$0xff] %v1627
      %s1630 = smul.u32 2, %s20
      %p1631 = scmp.lt.s32.totalorder %s1630, 3
      %s1632 = scalar_select %p1631, %s1630, 3
      %s1633 = smul.addr %s1632, 4
      %s1634 = scalar_lea.vmem %s9, %s1633
      // Predicated region
      $region57: #{subnet_forward.1} parent=55 // pred_check
        %p1635 = pneg %p237
      $region58: #{subnet_forward.1} parent=55 // pred_check_branch
        %1637 = sbr.rel (%p1635) target = $region60
      $region59: #{subnet_forward.1} parent=55 // pred_region
        %s1638 = smul.u32 2, %s20
      $region60: #{subnet_forward.1} parent=55 // pred_fallthru
        _
    $region56: #{subnet_forward.1} parent=5 // pred_fallthru
      _
    %p1639 = scmp.le.s32.totalorder 2, %s15
    // Predicated region
    $region61: #{subnet_forward.1} parent=5 // pred_check
      %p1640 = pneg %p1639
    $region62: #{subnet_forward.1} parent=5 // pred_check_branch
      %1642 = sbr.rel (%p1640) target = $region64
    $region63: #{subnet_forward.1} parent=5 // pred_region
      %s1643 = ssub.s32 %s15, 2
      // Predicated region
      $region65: #{subnet_forward.1} parent=63 // pred_check
        %p1644 = pneg %p243
      $region66: #{subnet_forward.1} parent=63 // pred_check_branch
        %1646 = sbr.rel (%p1644) target = $region68
      $region67: #{subnet_forward.1} parent=63 // pred_region
        %s1647 = smul.u32 2, %s21
        %p1648 = scmp.lt.s32.totalorder %s1647, 3
        %s1649 = scalar_select %p1648, %s1647, 3
        %s1650 = smul.addr %s1649, 4
        %s1651 = scalar_lea.vmem %s9, %s1650
      $region68: #{subnet_forward.1} parent=63 // pred_fallthru
        _
    $region64: #{subnet_forward.1} parent=5 // pred_fallthru
      _
  $region6: #{subnet_forward.1} parent=0 // loop_footer
    %s19 = sadd.s32 1, %s15
  $region7: #{subnet_forward.1} parent=0 // loop_footer_branch
    %14 = sbr.rel target = $region3
  $region8: #{subnet_forward.1} parent=0 // loop_exit
    _

</llo_original>
